<compile_context>
chip_gen: v7x
topology: tpu7x:2x2x1
jax: 0.10.0
libtpu: 0.0.40
codegen_flags: <defaults>
</compile_context>

<pallas_src>
import functools

import jax
import jax.numpy as jnp
import numpy as np
from jax.experimental import pallas as pl
from jax.experimental.pallas import tpu as pltpu


# ---------------------------------------------------------------------------
# Fused kernel: conv block 1 -> conv block 2 -> flatten -> FF classifier
# ---------------------------------------------------------------------------
def _full_model_kernel(xp_ref, w1b_ref, b1_ref, w2b_ref, b2_ref, slopes_ref,
                       *rest,
                       TB, H, W, F1, F2, KH, PH, H1, H2, PT, n_ff, mxu_dtype):
    # xp_ref:     (TB, H+KH-1, W)     row-padded input tile (width padding is
    #                                 folded into the banded weights)
    # w1b_ref:    (KH, W, W*F1)       per-dy banded conv1 weights (BN folded)
    # b1_ref:     (1, W*F1)           conv1 bias + BN (eval), tiled over w
    # w2b_ref:    (KH, W*F1, W*F2)    per-dy banded conv2 weights (BN folded)
    # b2_ref:     (1, W*F2)
    # slopes_ref: (1, 2 + n_ff - 1)   PReLU slopes [a1, a2, a_ff0, ...]
    # rest:       2*n_ff FF (W, b) refs, then out_ref (1, TB, out_dim)
    ff_refs = rest[:2 * n_ff]
    out_ref = rest[2 * n_ff]
    f32 = jnp.float32
    WF1, WF2 = W * F1, W * F2
    PB = KH - 1 - PT

    # ---- Block 1: Conv2d(1->F1, 'same') as KH banded MXU GEMMs.  Output lane
    # index is the interleaved (w, f) coordinate -> 128-lane dense epilogue.
    y1 = None
    for dy in range(KH):
        a = xp_ref[:, dy:dy + H, :].reshape(TB * H, W).astype(mxu_dtype)
        t = jnp.dot(a, w1b_ref[dy], preferred_element_type=f32)
        y1 = t if y1 is None else y1 + t
    y1 = y1 + b1_ref[...]
    a1 = slopes_ref[:, 0:1]
    y1 = jnp.where(y1 >= 0.0, y1, a1 * y1)              # PReLU
    # Dropout2d: identity in eval mode.
    # MaxPool2d((PH, 1)) over rows; assemble the row-padded block-2 activation
    # in the same concat (zero rows top/bottom; width pad lives in the weights).
    y1 = y1.reshape(TB, H, WF1)
    rows = [jnp.zeros((TB, PT, WF1), f32)]
    for h1 in range(H1):
        r = y1[:, PH * h1, :]
        for p in range(1, PH):
            r = jnp.maximum(r, y1[:, PH * h1 + p, :])
        rows.append(r[:, None, :])
    rows.append(jnp.zeros((TB, PB, WF1), f32))
    m1p = jnp.concatenate(rows, axis=1)                  # (TB, H1+KH-1, WF1)

    # ---- Block 2: Conv2d(F1->F2, 'same') as KH banded MXU GEMMs.
    y2 = None
    for dy in range(KH):
        a = m1p[:, dy:dy + H1, :].reshape(TB * H1, WF1).astype(mxu_dtype)
        t = jnp.dot(a, w2b_ref[dy], preferred_element_type=f32)
        y2 = t if y2 is None else y2 + t
    y2 = y2 + b2_ref[...]
    a2 = slopes_ref[:, 1:2]
    y2 = jnp.where(y2 >= 0.0, y2, a2 * y2)               # PReLU
    y2 = y2.reshape(TB, H1, WF2)
    # MaxPool2d((PH, 1)) + flatten: a tile-aligned lane concat of the H2 pooled
    # 256-lane rows; feature order is (h2, w, g) and the first FF weight's rows
    # were permuted in the wrapper to match torch's (g, h2, w) flatten.
    pooled = []
    for h2 in range(H2):
        r = y2[:, PH * h2, :]
        for p in range(1, PH):
            r = jnp.maximum(r, y2[:, PH * h2 + p, :])
        pooled.append(r)
    feat = pooled[0] if H2 == 1 else jnp.concatenate(pooled, axis=-1)

    # ---- FF classifier: Linear (+ PReLU on all but the last layer).
    z = feat                                             # (TB, D0)
    for li in range(n_ff):
        wr = ff_refs[2 * li]
        br = ff_refs[2 * li + 1]
        z = jnp.dot(z.astype(mxu_dtype), wr[...],
                    preferred_element_type=f32) + br[...]
        if li < n_ff - 1:
            a = slopes_ref[:, 2 + li:3 + li]
            z = jnp.where(z >= 0.0, z, a * z)
    out_ref[0] = z


# ---------------------------------------------------------------------------
# Wrapper: fold BN, build banded weights, permute FF weights, launch kernel.
# ---------------------------------------------------------------------------
def full_model_forward(x, params, *, pool_h=3, eps=1e-5, block_b=None,
                       mxu_dtype=jnp.float32):
    """x: (B, H, W) — the input the PyTorch module sees before unsqueeze(1)."""
    f32 = jnp.float32
    B, H, W = x.shape
    w1 = params["w1"].astype(f32)                        # (F1, 1, KH, KW)
    w2 = params["w2"].astype(f32)                        # (F2, F1, KH, KW)
    F1, _, KH, KW = w1.shape
    F2 = w2.shape[0]
    PH = pool_h
    PT, PB = (KH - 1) // 2, KH // 2                      # torch 'same' (odd KH)
    PL = (KW - 1) // 2
    H1 = H // PH
    H2 = H1 // PH
    Hp = H + KH - 1
    assert H2 >= 1, "input too small for two (pool_h, 1) max-pools"
    ff_w, ff_b, ff_a = params["ff_w"], params["ff_b"], params["ff_a"]
    n_ff = len(ff_w)
    out_dim = ff_w[-1].shape[0]
    D0 = F2 * H2 * W
    assert ff_w[0].shape[1] == D0

    # Batch tile: amortize the ~0.35us per-step overhead while keeping >= 2
    # grid steps so the "parallel" batch axis can split across v7x's 2 TCs.
    # Per-sample VMEM footprint is ~10 KB, so block_b=32 stays far below the
    # v7x 64 MiB VMEM budget (weights ~0.9 MB are step-invariant).
    if block_b is None:
        block_b = max(1, min(32, B // 2)) if B >= 2 else 1
    Bp = ((B + block_b - 1) // block_b) * block_b        # remainder -> zero pad
    n_steps = Bp // block_b

    # Row-padded (and batch-padded) input; the width 'same' padding is folded
    # into the banded weights, so the input minor dim stays W lanes.
    xp = jnp.pad(x.astype(f32), ((0, Bp - B), (PT, PB), (0, 0)))

    # Fold conv bias + BatchNorm (eval, running stats) into per-channel
    # scale/bias; fold the scale into the weights.
    s1 = params["g1"].astype(f32) * jax.lax.rsqrt(params["v1"].astype(f32) + eps)
    s2 = params["g2"].astype(f32) * jax.lax.rsqrt(params["v2"].astype(f32) + eps)
    bias1 = (params["b1"].astype(f32) - params["m1"].astype(f32)) * s1 \
        + params["be1"].astype(f32)
    bias2 = (params["b2"].astype(f32) - params["m2"].astype(f32)) * s2 \
        + params["be2"].astype(f32)
    w1_sc = w1[:, 0] * s1[:, None, None]                 # (F1, KH, KW)
    w2_sc = w2 * s2[:, None, None, None]                 # (F2, F1, KH, KW)

    # Banded weights: sel[dx, w_in, w_out] selects w_in == w_out + dx - PL and
    # encodes the width zero padding.  Kernel GEMM output lane = w*F + c.
    sel_np = np.zeros((KW, W, W), np.float32)
    for dx in range(KW):
        for wo in range(W):
            wi = wo + dx - PL
            if 0 <= wi < W:
                sel_np[dx, wi, wo] = 1.0
    sel = jnp.asarray(sel_np)
    w1b = jnp.einsum("fyx,xiw->yiwf", w1_sc, sel).reshape(KH, W, W * F1)
    w2b = jnp.einsum("gfyx,xiw->yifwg", w2_sc, sel).reshape(KH, W * F1, W * F2)
    b1t = jnp.tile(bias1, W).reshape(1, W * F1)
    b2t = jnp.tile(bias2, W).reshape(1, W * F2)
    w1b = w1b.astype(mxu_dtype)
    w2b = w2b.astype(mxu_dtype)

    # FF weights -> (in, out); first layer rows permuted from torch's flatten
    # order (c, h, w) to the kernel's (h, w, c) order.
    ff_ops = []
    for li in range(n_ff):
        Wt = ff_w[li].astype(f32)
        dout = Wt.shape[0]
        if li == 0:
            Wk = Wt.reshape(dout, F2, H2, W).transpose(2, 3, 1, 0).reshape(D0, dout)
        else:
            Wk = Wt.T
        ff_ops.append(Wk.astype(mxu_dtype))
        ff_ops.append(ff_b[li].astype(f32).reshape(1, dout))

    slopes = jnp.concatenate(
        [params["a1"].reshape(1), params["a2"].reshape(1)]
        + [a.reshape(1) for a in ff_a]).astype(f32).reshape(1, -1)

    kernel = functools.partial(
        _full_model_kernel, TB=block_b, H=H, W=W, F1=F1, F2=F2, KH=KH, PH=PH,
        H1=H1, H2=H2, PT=PT, n_ff=n_ff, mxu_dtype=mxu_dtype)

    in_specs = [
        pl.BlockSpec((block_b, Hp, W), lambda i: (i, 0, 0)),      # input tile
        pl.BlockSpec(w1b.shape, lambda i: (0, 0, 0)),             # banded w1
        pl.BlockSpec(b1t.shape, lambda i: (0, 0)),
        pl.BlockSpec(w2b.shape, lambda i: (0, 0, 0)),             # banded w2
        pl.BlockSpec(b2t.shape, lambda i: (0, 0)),
        pl.BlockSpec(slopes.shape, lambda i: (0, 0)),             # PReLU slopes
    ]
    for arr in ff_ops:
        in_specs.append(pl.BlockSpec(arr.shape, lambda i: (0, 0)))
    out_specs = pl.BlockSpec((1, block_b, out_dim), lambda i: (i, 0, 0))

    flops = 2 * Bp * (H * KH * W * (W * F1)
                      + H1 * KH * (W * F1) * (W * F2)
                      + sum(int(w.shape[0]) * int(w.shape[1])
                            for w in ff_ops[0::2]))
    bytes_accessed = (4 * int(xp.size) + 4 * Bp * out_dim
                      + sum(int(a.size) * a.dtype.itemsize
                            for a in [w1b, w2b] + ff_ops)
                      + 4 * int(b1t.size + b2t.size + slopes.size))

    out = pl.pallas_call(
        kernel,
        out_shape=jax.ShapeDtypeStruct((n_steps, block_b, out_dim), f32),
        grid_spec=pltpu.PrefetchScalarGridSpec(
            num_scalar_prefetch=0,
            grid=(n_steps,),
            in_specs=in_specs,
            out_specs=out_specs),
        compiler_params=pltpu.CompilerParams(
            dimension_semantics=("parallel",),           # batch tiles independent
            vmem_limit_bytes=32 * 1024 * 1024),
        cost_estimate=pl.CostEstimate(flops=flops, transcendentals=0,
                                      bytes_accessed=int(bytes_accessed)),
    )(xp, w1b, b1t, w2b, b2t, slopes, *ff_ops)
    return out.reshape(Bp, out_dim)[:B]


# ---------------------------------------------------------------------------
# Pure-JAX reference (lax conv / reduce_window / dense) for correctness check.
# ---------------------------------------------------------------------------
def _ref_block(x_nchw, w, b, gamma, beta, mean, var, a, pool_h, eps=1e-5):
    y = jax.lax.conv_general_dilated(
        x_nchw, w, window_strides=(1, 1), padding="SAME",
        dimension_numbers=("NCHW", "OIHW", "NCHW"),
        precision=jax.lax.Precision.HIGHEST)
    y = y + b[None, :, None, None]
    inv = jax.lax.rsqrt(var + eps)
    y = (y - mean[None, :, None, None]) * (gamma * inv)[None, :, None, None] \
        + beta[None, :, None, None]
    y = jnp.where(y >= 0.0, y, a * y)
    y = jax.lax.reduce_window(y, -jnp.inf, jax.lax.max,
                              (1, 1, pool_h, 1), (1, 1, pool_h, 1), "VALID")
    return y


def _ref_forward(x, p, pool_h=3):
    y = x[:, None, :, :].astype(jnp.float32)
    y = _ref_block(y, p["w1"], p["b1"], p["g1"], p["be1"], p["m1"], p["v1"],
                   p["a1"][0], pool_h)
    y = _ref_block(y, p["w2"], p["b2"], p["g2"], p["be2"], p["m2"], p["v2"],
                   p["a2"][0], pool_h)
    y = y.reshape(x.shape[0], -1)                        # torch flatten (C,H,W)
    n_ff = len(p["ff_w"])
    for li in range(n_ff):
        y = jnp.dot(y, p["ff_w"][li].T, precision=jax.lax.Precision.HIGHEST) \
            + p["ff_b"][li]
        if li < n_ff - 1:
            a = p["ff_a"][li][0]
            y = jnp.where(y >= 0.0, y, a * y)
    return y


if __name__ == "__main__":
    # Small shapes consistent with the module: filters=[8,16], kernel=(5,3),
    # pool=(3,1), input (B, H, W) = (2, 9, 16), hidden=[32,16], output_dim=4.
    B, H, W = 2, 9, 16
    F1, F2 = 8, 16
    KH, KW = 5, 3
    POOL_H = 3
    HIDDEN = [32, 16]
    OUT = 4
    H2 = (H // POOL_H) // POOL_H
    D0 = F2 * H2 * W                       # flattened conv-encoder dim = 256

    key = jax.random.PRNGKey(0)
    ks = jax.random.split(key, 20)
    f32 = jnp.float32
    params = {
        "w1": 0.2 * jax.random.normal(ks[0], (F1, 1, KH, KW), f32),
        "b1": 0.1 * jax.random.normal(ks[1], (F1,), f32),
        "g1": 1.0 + 0.1 * jax.random.normal(ks[2], (F1,), f32),
        "be1": 0.1 * jax.random.normal(ks[3], (F1,), f32),
        "m1": 0.1 * jax.random.normal(ks[4], (F1,), f32),
        "v1": jnp.abs(jax.random.normal(ks[5], (F1,), f32)) + 0.5,
        "a1": jnp.array([0.25], f32),                    # nn.PReLU() default
        "w2": 0.1 * jax.random.normal(ks[6], (F2, F1, KH, KW), f32),
        "b2": 0.1 * jax.random.normal(ks[7], (F2,), f32),
        "g2": 1.0 + 0.1 * jax.random.normal(ks[8], (F2,), f32),
        "be2": 0.1 * jax.random.normal(ks[9], (F2,), f32),
        "m2": 0.1 * jax.random.normal(ks[10], (F2,), f32),
        "v2": jnp.abs(jax.random.normal(ks[11], (F2,), f32)) + 0.5,
        "a2": jnp.array([0.25], f32),
        "ff_w": [0.1 * jax.random.normal(ks[12], (HIDDEN[0], D0), f32),
                 0.2 * jax.random.normal(ks[13], (HIDDEN[1], HIDDEN[0]), f32),
                 0.3 * jax.random.normal(ks[14], (OUT, HIDDEN[1]), f32)],
        "ff_b": [0.1 * jax.random.normal(ks[15], (HIDDEN[0],), f32),
                 0.1 * jax.random.normal(ks[16], (HIDDEN[1],), f32),
                 0.1 * jax.random.normal(ks[17], (OUT,), f32)],
        "ff_a": [jnp.array([0.25], f32), jnp.array([0.25], f32)],
    }
    x = jax.random.normal(ks[18], (B, H, W), f32)

    fwd = jax.jit(functools.partial(full_model_forward, pool_h=POOL_H))
    out = jax.block_until_ready(fwd(x, params))

    ref = jax.block_until_ready(_ref_forward(x, params, pool_h=POOL_H))
    assert out.shape == ref.shape == (B, OUT), (out.shape, ref.shape)
    # MXU default f32 precision + different summation order -> 5e-4 tolerance.
    np.testing.assert_allclose(np.asarray(out), np.asarray(ref),
                               rtol=5e-4, atol=5e-4)
    print("KERNEL_OK")
</pallas_src>

<mosaic_0001>
module attributes {stable_mosaic.version = 11 : i64} {
  func.func @_full_model_kernel(%arg0: i32, %arg1: memref<1x13x16xf32, #tpu.memory_space<vmem>>, %arg2: memref<5x16x128xf32, #tpu.memory_space<vmem>>, %arg3: memref<1x128xf32, #tpu.memory_space<vmem>>, %arg4: memref<5x128x256xf32, #tpu.memory_space<vmem>>, %arg5: memref<1x256xf32, #tpu.memory_space<vmem>>, %arg6: memref<1x4xf32, #tpu.memory_space<vmem>>, %arg7: memref<256x32xf32, #tpu.memory_space<vmem>>, %arg8: memref<1x32xf32, #tpu.memory_space<vmem>>, %arg9: memref<32x16xf32, #tpu.memory_space<vmem>>, %arg10: memref<1x16xf32, #tpu.memory_space<vmem>>, %arg11: memref<16x4xf32, #tpu.memory_space<vmem>>, %arg12: memref<1x4xf32, #tpu.memory_space<vmem>>, %arg13: memref<1x1x4xf32, #tpu.memory_space<vmem>>) attributes {dimension_semantics = [#tpu.dimension_semantics<parallel>], iteration_bounds = array<i64: 2>, scalar_prefetch = 0 : i64, scratch_operands = 0 : i64, tpu.core_type = #tpu.core_type<tc>, window_params = [{transform_indices = @transform_0, window_bounds = array<i64: 1, 13, 16>}, {pipeline_mode = #tpu.pipeline_mode<synchronous>, transform_indices = @transform_1, window_bounds = array<i64: 5, 16, 128>}, {pipeline_mode = #tpu.pipeline_mode<synchronous>, transform_indices = @transform_2, window_bounds = array<i64: 1, 128>}, {pipeline_mode = #tpu.pipeline_mode<synchronous>, transform_indices = @transform_3, window_bounds = array<i64: 5, 128, 256>}, {pipeline_mode = #tpu.pipeline_mode<synchronous>, transform_indices = @transform_4, window_bounds = array<i64: 1, 256>}, {pipeline_mode = #tpu.pipeline_mode<synchronous>, transform_indices = @transform_5, window_bounds = array<i64: 1, 4>}, {pipeline_mode = #tpu.pipeline_mode<synchronous>, transform_indices = @transform_6, window_bounds = array<i64: 256, 32>}, {pipeline_mode = #tpu.pipeline_mode<synchronous>, transform_indices = @transform_7, window_bounds = array<i64: 1, 32>}, {pipeline_mode = #tpu.pipeline_mode<synchronous>, transform_indices = @transform_8, window_bounds = array<i64: 32, 16>}, {pipeline_mode = #tpu.pipeline_mode<synchronous>, transform_indices = @transform_9, window_bounds = array<i64: 1, 16>}, {pipeline_mode = #tpu.pipeline_mode<synchronous>, transform_indices = @transform_10, window_bounds = array<i64: 16, 4>}, {pipeline_mode = #tpu.pipeline_mode<synchronous>, transform_indices = @transform_11, window_bounds = array<i64: 1, 4>}, {transform_indices = @transform_12, window_bounds = array<i64: 1, 1, 4>}]} {
    %c0 = arith.constant 0 : index
    %c0_0 = arith.constant 0 : index
    %c0_1 = arith.constant 0 : index
    %0 = vector.load %arg1[%c0, %c0_0, %c0_1] : memref<1x13x16xf32, #tpu.memory_space<vmem>>, vector<1x9x16xf32>
    %1 = vector.shape_cast %0 : vector<1x9x16xf32> to vector<9x16xf32>
    %c0_2 = arith.constant 0 : index
    %c0_3 = arith.constant 0 : index
    %c0_4 = arith.constant 0 : index
    %2 = vector.load %arg2[%c0_2, %c0_3, %c0_4] : memref<5x16x128xf32, #tpu.memory_space<vmem>>, vector<1x16x128xf32>
    %3 = vector.shape_cast %2 : vector<1x16x128xf32> to vector<16x128xf32>
    %cst = arith.constant dense<0.000000e+00> : vector<9x128xf32>
    %4 = tpu.matmul %1, %3, %cst {dimension_numbers = #tpu.dot_dimension_numbers<[1], [0], [0], [1], [0, 0, 1, 1], [], []>} : vector<9x16xf32>, vector<16x128xf32>, vector<9x128xf32> -> vector<9x128xf32>
    %c0_5 = arith.constant 0 : index
    %c1 = arith.constant 1 : index
    %c0_6 = arith.constant 0 : index
    %5 = vector.load %arg1[%c0_5, %c1, %c0_6] : memref<1x13x16xf32, #tpu.memory_space<vmem>>, vector<1x9x16xf32>
    %6 = vector.shape_cast %5 : vector<1x9x16xf32> to vector<9x16xf32>
    %c1_7 = arith.constant 1 : index
    %c0_8 = arith.constant 0 : index
    %c0_9 = arith.constant 0 : index
    %7 = vector.load %arg2[%c1_7, %c0_8, %c0_9] : memref<5x16x128xf32, #tpu.memory_space<vmem>>, vector<1x16x128xf32>
    %8 = vector.shape_cast %7 : vector<1x16x128xf32> to vector<16x128xf32>
    %cst_10 = arith.constant dense<0.000000e+00> : vector<9x128xf32>
    %9 = tpu.matmul %6, %8, %cst_10 {dimension_numbers = #tpu.dot_dimension_numbers<[1], [0], [0], [1], [0, 0, 1, 1], [], []>} : vector<9x16xf32>, vector<16x128xf32>, vector<9x128xf32> -> vector<9x128xf32>
    %10 = arith.addf %4, %9 : vector<9x128xf32>
    %c0_11 = arith.constant 0 : index
    %c2 = arith.constant 2 : index
    %c0_12 = arith.constant 0 : index
    %11 = vector.load %arg1[%c0_11, %c2, %c0_12] : memref<1x13x16xf32, #tpu.memory_space<vmem>>, vector<1x9x16xf32>
    %12 = vector.shape_cast %11 : vector<1x9x16xf32> to vector<9x16xf32>
    %c2_13 = arith.constant 2 : index
    %c0_14 = arith.constant 0 : index
    %c0_15 = arith.constant 0 : index
    %13 = vector.load %arg2[%c2_13, %c0_14, %c0_15] : memref<5x16x128xf32, #tpu.memory_space<vmem>>, vector<1x16x128xf32>
    %14 = vector.shape_cast %13 : vector<1x16x128xf32> to vector<16x128xf32>
    %cst_16 = arith.constant dense<0.000000e+00> : vector<9x128xf32>
    %15 = tpu.matmul %12, %14, %cst_16 {dimension_numbers = #tpu.dot_dimension_numbers<[1], [0], [0], [1], [0, 0, 1, 1], [], []>} : vector<9x16xf32>, vector<16x128xf32>, vector<9x128xf32> -> vector<9x128xf32>
    %16 = arith.addf %10, %15 : vector<9x128xf32>
    %c0_17 = arith.constant 0 : index
    %c3 = arith.constant 3 : index
    %c0_18 = arith.constant 0 : index
    %17 = vector.load %arg1[%c0_17, %c3, %c0_18] : memref<1x13x16xf32, #tpu.memory_space<vmem>>, vector<1x9x16xf32>
    %18 = vector.shape_cast %17 : vector<1x9x16xf32> to vector<9x16xf32>
    %c3_19 = arith.constant 3 : index
    %c0_20 = arith.constant 0 : index
    %c0_21 = arith.constant 0 : index
    %19 = vector.load %arg2[%c3_19, %c0_20, %c0_21] : memref<5x16x128xf32, #tpu.memory_space<vmem>>, vector<1x16x128xf32>
    %20 = vector.shape_cast %19 : vector<1x16x128xf32> to vector<16x128xf32>
    %cst_22 = arith.constant dense<0.000000e+00> : vector<9x128xf32>
    %21 = tpu.matmul %18, %20, %cst_22 {dimension_numbers = #tpu.dot_dimension_numbers<[1], [0], [0], [1], [0, 0, 1, 1], [], []>} : vector<9x16xf32>, vector<16x128xf32>, vector<9x128xf32> -> vector<9x128xf32>
    %22 = arith.addf %16, %21 : vector<9x128xf32>
    %c0_23 = arith.constant 0 : index
    %c4 = arith.constant 4 : index
    %c0_24 = arith.constant 0 : index
    %23 = vector.load %arg1[%c0_23, %c4, %c0_24] : memref<1x13x16xf32, #tpu.memory_space<vmem>>, vector<1x9x16xf32>
    %24 = vector.shape_cast %23 : vector<1x9x16xf32> to vector<9x16xf32>
    %c4_25 = arith.constant 4 : index
    %c0_26 = arith.constant 0 : index
    %c0_27 = arith.constant 0 : index
    %25 = vector.load %arg2[%c4_25, %c0_26, %c0_27] : memref<5x16x128xf32, #tpu.memory_space<vmem>>, vector<1x16x128xf32>
    %26 = vector.shape_cast %25 : vector<1x16x128xf32> to vector<16x128xf32>
    %cst_28 = arith.constant dense<0.000000e+00> : vector<9x128xf32>
    %27 = tpu.matmul %24, %26, %cst_28 {dimension_numbers = #tpu.dot_dimension_numbers<[1], [0], [0], [1], [0, 0, 1, 1], [], []>} : vector<9x16xf32>, vector<16x128xf32>, vector<9x128xf32> -> vector<9x128xf32>
    %28 = arith.addf %22, %27 : vector<9x128xf32>
    %c0_29 = arith.constant 0 : index
    %c0_30 = arith.constant 0 : index
    %29 = vector.load %arg3[%c0_29, %c0_30] : memref<1x128xf32, #tpu.memory_space<vmem>>, vector<1x128xf32>
    %30 = vector.broadcast %29 : vector<1x128xf32> to vector<9x128xf32>
    %31 = arith.addf %28, %30 : vector<9x128xf32>
    %c0_31 = arith.constant 0 : index
    %c0_32 = arith.constant 0 : index
    %32 = vector.load %arg6[%c0_31, %c0_32] : memref<1x4xf32, #tpu.memory_space<vmem>>, vector<1x1xf32>
    %cst_33 = arith.constant 0.000000e+00 : f32
    %33 = vector.broadcast %cst_33 : f32 to vector<9x128xf32>
    %34 = arith.cmpf oge, %31, %33 : vector<9x128xf32>
    %35 = vector.broadcast %32 : vector<1x1xf32> to vector<9x128xf32>
    %36 = arith.mulf %35, %31 : vector<9x128xf32>
    %37 = arith.select %34, %31, %36 : vector<9x128xi1>, vector<9x128xf32>
    %38 = vector.shape_cast %37 : vector<9x128xf32> to vector<1x9x128xf32>
    %cst_34 = arith.constant 0.000000e+00 : f32
    %39 = vector.broadcast %cst_34 : f32 to vector<1x2x128xf32>
    %40 = vector.extract_strided_slice %38 {offsets = [0, 0, 0], sizes = [1, 1, 128], strides = [1, 1, 1]} : vector<1x9x128xf32> to vector<1x1x128xf32>
    %41 = vector.shape_cast %40 : vector<1x1x128xf32> to vector<1x128xf32>
    %42 = vector.extract_strided_slice %38 {offsets = [0, 1, 0], sizes = [1, 1, 128], strides = [1, 1, 1]} : vector<1x9x128xf32> to vector<1x1x128xf32>
    %43 = vector.shape_cast %42 : vector<1x1x128xf32> to vector<1x128xf32>
    %44 = arith.maximumf %41, %43 : vector<1x128xf32>
    %45 = vector.extract_strided_slice %38 {offsets = [0, 2, 0], sizes = [1, 1, 128], strides = [1, 1, 1]} : vector<1x9x128xf32> to vector<1x1x128xf32>
    %46 = vector.shape_cast %45 : vector<1x1x128xf32> to vector<1x128xf32>
    %47 = arith.maximumf %44, %46 : vector<1x128xf32>
    %48 = vector.shape_cast %47 : vector<1x128xf32> to vector<1x1x128xf32>
    %49 = vector.extract_strided_slice %38 {offsets = [0, 3, 0], sizes = [1, 1, 128], strides = [1, 1, 1]} : vector<1x9x128xf32> to vector<1x1x128xf32>
    %50 = vector.shape_cast %49 : vector<1x1x128xf32> to vector<1x128xf32>
    %51 = vector.extract_strided_slice %38 {offsets = [0, 4, 0], sizes = [1, 1, 128], strides = [1, 1, 1]} : vector<1x9x128xf32> to vector<1x1x128xf32>
    %52 = vector.shape_cast %51 : vector<1x1x128xf32> to vector<1x128xf32>
    %53 = arith.maximumf %50, %52 : vector<1x128xf32>
    %54 = vector.extract_strided_slice %38 {offsets = [0, 5, 0], sizes = [1, 1, 128], strides = [1, 1, 1]} : vector<1x9x128xf32> to vector<1x1x128xf32>
    %55 = vector.shape_cast %54 : vector<1x1x128xf32> to vector<1x128xf32>
    %56 = arith.maximumf %53, %55 : vector<1x128xf32>
    %57 = vector.shape_cast %56 : vector<1x128xf32> to vector<1x1x128xf32>
    %58 = vector.extract_strided_slice %38 {offsets = [0, 6, 0], sizes = [1, 1, 128], strides = [1, 1, 1]} : vector<1x9x128xf32> to vector<1x1x128xf32>
    %59 = vector.shape_cast %58 : vector<1x1x128xf32> to vector<1x128xf32>
    %60 = vector.extract_strided_slice %38 {offsets = [0, 7, 0], sizes = [1, 1, 128], strides = [1, 1, 1]} : vector<1x9x128xf32> to vector<1x1x128xf32>
    %61 = vector.shape_cast %60 : vector<1x1x128xf32> to vector<1x128xf32>
    %62 = arith.maximumf %59, %61 : vector<1x128xf32>
    %63 = vector.extract_strided_slice %38 {offsets = [0, 8, 0], sizes = [1, 1, 128], strides = [1, 1, 1]} : vector<1x9x128xf32> to vector<1x1x128xf32>
    %64 = vector.shape_cast %63 : vector<1x1x128xf32> to vector<1x128xf32>
    %65 = arith.maximumf %62, %64 : vector<1x128xf32>
    %66 = vector.shape_cast %65 : vector<1x128xf32> to vector<1x1x128xf32>
    %cst_35 = arith.constant 0.000000e+00 : f32
    %67 = vector.broadcast %cst_35 : f32 to vector<1x2x128xf32>
    %68 = tpu.concatenate %39, %48, %57, %66, %67 in 1 : vector<1x2x128xf32>, vector<1x1x128xf32>, vector<1x1x128xf32>, vector<1x1x128xf32>, vector<1x2x128xf32> -> vector<1x7x128xf32>
    %69 = vector.extract_strided_slice %68 {offsets = [0, 0, 0], sizes = [1, 3, 128], strides = [1, 1, 1]} : vector<1x7x128xf32> to vector<1x3x128xf32>
    %70 = vector.shape_cast %69 : vector<1x3x128xf32> to vector<3x128xf32>
    %c0_36 = arith.constant 0 : index
    %c0_37 = arith.constant 0 : index
    %c0_38 = arith.constant 0 : index
    %71 = vector.load %arg4[%c0_36, %c0_37, %c0_38] : memref<5x128x256xf32, #tpu.memory_space<vmem>>, vector<1x128x256xf32>
    %72 = vector.shape_cast %71 : vector<1x128x256xf32> to vector<128x256xf32>
    %cst_39 = arith.constant dense<0.000000e+00> : vector<3x256xf32>
    %73 = tpu.matmul %70, %72, %cst_39 {dimension_numbers = #tpu.dot_dimension_numbers<[1], [0], [0], [1], [0, 0, 1, 1], [], []>} : vector<3x128xf32>, vector<128x256xf32>, vector<3x256xf32> -> vector<3x256xf32>
    %74 = vector.extract_strided_slice %68 {offsets = [0, 1, 0], sizes = [1, 3, 128], strides = [1, 1, 1]} : vector<1x7x128xf32> to vector<1x3x128xf32>
    %75 = vector.shape_cast %74 : vector<1x3x128xf32> to vector<3x128xf32>
    %c1_40 = arith.constant 1 : index
    %c0_41 = arith.constant 0 : index
    %c0_42 = arith.constant 0 : index
    %76 = vector.load %arg4[%c1_40, %c0_41, %c0_42] : memref<5x128x256xf32, #tpu.memory_space<vmem>>, vector<1x128x256xf32>
    %77 = vector.shape_cast %76 : vector<1x128x256xf32> to vector<128x256xf32>
    %cst_43 = arith.constant dense<0.000000e+00> : vector<3x256xf32>
    %78 = tpu.matmul %75, %77, %cst_43 {dimension_numbers = #tpu.dot_dimension_numbers<[1], [0], [0], [1], [0, 0, 1, 1], [], []>} : vector<3x128xf32>, vector<128x256xf32>, vector<3x256xf32> -> vector<3x256xf32>
    %79 = arith.addf %73, %78 : vector<3x256xf32>
    %80 = vector.extract_strided_slice %68 {offsets = [0, 2, 0], sizes = [1, 3, 128], strides = [1, 1, 1]} : vector<1x7x128xf32> to vector<1x3x128xf32>
    %81 = vector.shape_cast %80 : vector<1x3x128xf32> to vector<3x128xf32>
    %c2_44 = arith.constant 2 : index
    %c0_45 = arith.constant 0 : index
    %c0_46 = arith.constant 0 : index
    %82 = vector.load %arg4[%c2_44, %c0_45, %c0_46] : memref<5x128x256xf32, #tpu.memory_space<vmem>>, vector<1x128x256xf32>
    %83 = vector.shape_cast %82 : vector<1x128x256xf32> to vector<128x256xf32>
    %cst_47 = arith.constant dense<0.000000e+00> : vector<3x256xf32>
    %84 = tpu.matmul %81, %83, %cst_47 {dimension_numbers = #tpu.dot_dimension_numbers<[1], [0], [0], [1], [0, 0, 1, 1], [], []>} : vector<3x128xf32>, vector<128x256xf32>, vector<3x256xf32> -> vector<3x256xf32>
    %85 = arith.addf %79, %84 : vector<3x256xf32>
    %86 = vector.extract_strided_slice %68 {offsets = [0, 3, 0], sizes = [1, 3, 128], strides = [1, 1, 1]} : vector<1x7x128xf32> to vector<1x3x128xf32>
    %87 = vector.shape_cast %86 : vector<1x3x128xf32> to vector<3x128xf32>
    %c3_48 = arith.constant 3 : index
    %c0_49 = arith.constant 0 : index
    %c0_50 = arith.constant 0 : index
    %88 = vector.load %arg4[%c3_48, %c0_49, %c0_50] : memref<5x128x256xf32, #tpu.memory_space<vmem>>, vector<1x128x256xf32>
    %89 = vector.shape_cast %88 : vector<1x128x256xf32> to vector<128x256xf32>
    %cst_51 = arith.constant dense<0.000000e+00> : vector<3x256xf32>
    %90 = tpu.matmul %87, %89, %cst_51 {dimension_numbers = #tpu.dot_dimension_numbers<[1], [0], [0], [1], [0, 0, 1, 1], [], []>} : vector<3x128xf32>, vector<128x256xf32>, vector<3x256xf32> -> vector<3x256xf32>
    %91 = arith.addf %85, %90 : vector<3x256xf32>
    %92 = vector.extract_strided_slice %68 {offsets = [0, 4, 0], sizes = [1, 3, 128], strides = [1, 1, 1]} : vector<1x7x128xf32> to vector<1x3x128xf32>
    %93 = vector.shape_cast %92 : vector<1x3x128xf32> to vector<3x128xf32>
    %c4_52 = arith.constant 4 : index
    %c0_53 = arith.constant 0 : index
    %c0_54 = arith.constant 0 : index
    %94 = vector.load %arg4[%c4_52, %c0_53, %c0_54] : memref<5x128x256xf32, #tpu.memory_space<vmem>>, vector<1x128x256xf32>
    %95 = vector.shape_cast %94 : vector<1x128x256xf32> to vector<128x256xf32>
    %cst_55 = arith.constant dense<0.000000e+00> : vector<3x256xf32>
    %96 = tpu.matmul %93, %95, %cst_55 {dimension_numbers = #tpu.dot_dimension_numbers<[1], [0], [0], [1], [0, 0, 1, 1], [], []>} : vector<3x128xf32>, vector<128x256xf32>, vector<3x256xf32> -> vector<3x256xf32>
    %97 = arith.addf %91, %96 : vector<3x256xf32>
    %c0_56 = arith.constant 0 : index
    %c0_57 = arith.constant 0 : index
    %98 = vector.load %arg5[%c0_56, %c0_57] : memref<1x256xf32, #tpu.memory_space<vmem>>, vector<1x256xf32>
    %99 = vector.broadcast %98 : vector<1x256xf32> to vector<3x256xf32>
    %100 = arith.addf %97, %99 : vector<3x256xf32>
    %c0_58 = arith.constant 0 : index
    %c1_59 = arith.constant 1 : index
    %101 = vector.load %arg6[%c0_58, %c1_59] : memref<1x4xf32, #tpu.memory_space<vmem>>, vector<1x1xf32>
    %cst_60 = arith.constant 0.000000e+00 : f32
    %102 = vector.broadcast %cst_60 : f32 to vector<3x256xf32>
    %103 = arith.cmpf oge, %100, %102 : vector<3x256xf32>
    %104 = vector.broadcast %101 : vector<1x1xf32> to vector<3x256xf32>
    %105 = arith.mulf %104, %100 : vector<3x256xf32>
    %106 = arith.select %103, %100, %105 : vector<3x256xi1>, vector<3x256xf32>
    %107 = vector.shape_cast %106 : vector<3x256xf32> to vector<1x3x256xf32>
    %108 = vector.extract_strided_slice %107 {offsets = [0, 0, 0], sizes = [1, 1, 256], strides = [1, 1, 1]} : vector<1x3x256xf32> to vector<1x1x256xf32>
    %109 = vector.shape_cast %108 : vector<1x1x256xf32> to vector<1x256xf32>
    %110 = vector.extract_strided_slice %107 {offsets = [0, 1, 0], sizes = [1, 1, 256], strides = [1, 1, 1]} : vector<1x3x256xf32> to vector<1x1x256xf32>
    %111 = vector.shape_cast %110 : vector<1x1x256xf32> to vector<1x256xf32>
    %112 = arith.maximumf %109, %111 : vector<1x256xf32>
    %113 = vector.extract_strided_slice %107 {offsets = [0, 2, 0], sizes = [1, 1, 256], strides = [1, 1, 1]} : vector<1x3x256xf32> to vector<1x1x256xf32>
    %114 = vector.shape_cast %113 : vector<1x1x256xf32> to vector<1x256xf32>
    %115 = arith.maximumf %112, %114 : vector<1x256xf32>
    %c0_61 = arith.constant 0 : index
    %c0_62 = arith.constant 0 : index
    %116 = vector.load %arg7[%c0_61, %c0_62] : memref<256x32xf32, #tpu.memory_space<vmem>>, vector<256x32xf32>
    %cst_63 = arith.constant dense<0.000000e+00> : vector<1x32xf32>
    %117 = tpu.matmul %115, %116, %cst_63 {dimension_numbers = #tpu.dot_dimension_numbers<[1], [0], [0], [1], [0, 0, 1, 1], [], []>} : vector<1x256xf32>, vector<256x32xf32>, vector<1x32xf32> -> vector<1x32xf32>
    %c0_64 = arith.constant 0 : index
    %c0_65 = arith.constant 0 : index
    %118 = vector.load %arg8[%c0_64, %c0_65] : memref<1x32xf32, #tpu.memory_space<vmem>>, vector<1x32xf32>
    %119 = arith.addf %117, %118 : vector<1x32xf32>
    %c0_66 = arith.constant 0 : index
    %c2_67 = arith.constant 2 : index
    %120 = vector.load %arg6[%c0_66, %c2_67] : memref<1x4xf32, #tpu.memory_space<vmem>>, vector<1x1xf32>
    %cst_68 = arith.constant 0.000000e+00 : f32
    %121 = vector.broadcast %cst_68 : f32 to vector<1x32xf32>
    %122 = arith.cmpf oge, %119, %121 : vector<1x32xf32>
    %123 = vector.broadcast %120 : vector<1x1xf32> to vector<1x32xf32>
    %124 = arith.mulf %123, %119 : vector<1x32xf32>
    %125 = arith.select %122, %119, %124 : vector<1x32xi1>, vector<1x32xf32>
    %c0_69 = arith.constant 0 : index
    %c0_70 = arith.constant 0 : index
    %126 = vector.load %arg9[%c0_69, %c0_70] : memref<32x16xf32, #tpu.memory_space<vmem>>, vector<32x16xf32>
    %cst_71 = arith.constant dense<0.000000e+00> : vector<1x16xf32>
    %127 = tpu.matmul %125, %126, %cst_71 {dimension_numbers = #tpu.dot_dimension_numbers<[1], [0], [0], [1], [0, 0, 1, 1], [], []>} : vector<1x32xf32>, vector<32x16xf32>, vector<1x16xf32> -> vector<1x16xf32>
    %c0_72 = arith.constant 0 : index
    %c0_73 = arith.constant 0 : index
    %128 = vector.load %arg10[%c0_72, %c0_73] : memref<1x16xf32, #tpu.memory_space<vmem>>, vector<1x16xf32>
    %129 = arith.addf %127, %128 : vector<1x16xf32>
    %c0_74 = arith.constant 0 : index
    %c3_75 = arith.constant 3 : index
    %130 = vector.load %arg6[%c0_74, %c3_75] : memref<1x4xf32, #tpu.memory_space<vmem>>, vector<1x1xf32>
    %cst_76 = arith.constant 0.000000e+00 : f32
    %131 = vector.broadcast %cst_76 : f32 to vector<1x16xf32>
    %132 = arith.cmpf oge, %129, %131 : vector<1x16xf32>
    %133 = vector.broadcast %130 : vector<1x1xf32> to vector<1x16xf32>
    %134 = arith.mulf %133, %129 : vector<1x16xf32>
    %135 = arith.select %132, %129, %134 : vector<1x16xi1>, vector<1x16xf32>
    %c0_77 = arith.constant 0 : index
    %c0_78 = arith.constant 0 : index
    %136 = vector.load %arg11[%c0_77, %c0_78] : memref<16x4xf32, #tpu.memory_space<vmem>>, vector<16x4xf32>
    %cst_79 = arith.constant dense<0.000000e+00> : vector<1x4xf32>
    %137 = tpu.matmul %135, %136, %cst_79 {dimension_numbers = #tpu.dot_dimension_numbers<[1], [0], [0], [1], [0, 0, 1, 1], [], []>} : vector<1x16xf32>, vector<16x4xf32>, vector<1x4xf32> -> vector<1x4xf32>
    %c0_80 = arith.constant 0 : index
    %c0_81 = arith.constant 0 : index
    %138 = vector.load %arg12[%c0_80, %c0_81] : memref<1x4xf32, #tpu.memory_space<vmem>>, vector<1x4xf32>
    %139 = arith.addf %137, %138 : vector<1x4xf32>
    %c0_82 = arith.constant 0 : index
    %c0_83 = arith.constant 0 : index
    %c0_84 = arith.constant 0 : index
    %140 = vector.load %arg13[%c0_82, %c0_83, %c0_84] : memref<1x1x4xf32, #tpu.memory_space<vmem>>, vector<1x1x4xf32>
    %141 = vector.shape_cast %140 : vector<1x1x4xf32> to vector<1x4xf32>
    %142 = vector.shape_cast %139 : vector<1x4xf32> to vector<1x1x4xf32>
    tpu.vector_store %arg13[%c0_82, %c0_83, %c0_84], %142 {strides = array<i32>} : memref<1x1x4xf32, #tpu.memory_space<vmem>>, vector<1x1x4xf32>,
    return
  }
  func.func @transform_0(%arg0: i32) -> (i32, i32, i32) {
    %c0_i32 = arith.constant 0 : i32
    %c0_i32_0 = arith.constant 0 : i32
    %c0_i32_1 = arith.constant 0 : i32
    return %arg0, %c0_i32, %c0_i32_0 : i32, i32, i32
  }
  func.func @transform_1(%arg0: i32) -> (i32, i32, i32) {
    %c0_i32 = arith.constant 0 : i32
    %c0_i32_0 = arith.constant 0 : i32
    %c0_i32_1 = arith.constant 0 : i32
    %c0_i32_2 = arith.constant 0 : i32
    return %c0_i32, %c0_i32_0, %c0_i32_1 : i32, i32, i32
  }
  func.func @transform_2(%arg0: i32) -> (i32, i32) {
    %c0_i32 = arith.constant 0 : i32
    %c0_i32_0 = arith.constant 0 : i32
    %c0_i32_1 = arith.constant 0 : i32
    return %c0_i32, %c0_i32_0 : i32, i32
  }
  func.func @transform_3(%arg0: i32) -> (i32, i32, i32) {
    %c0_i32 = arith.constant 0 : i32
    %c0_i32_0 = arith.constant 0 : i32
    %c0_i32_1 = arith.constant 0 : i32
    %c0_i32_2 = arith.constant 0 : i32
    return %c0_i32, %c0_i32_0, %c0_i32_1 : i32, i32, i32
  }
  func.func @transform_4(%arg0: i32) -> (i32, i32) {
    %c0_i32 = arith.constant 0 : i32
    %c0_i32_0 = arith.constant 0 : i32
    %c0_i32_1 = arith.constant 0 : i32
    return %c0_i32, %c0_i32_0 : i32, i32
  }
  func.func @transform_5(%arg0: i32) -> (i32, i32) {
    %c0_i32 = arith.constant 0 : i32
    %c0_i32_0 = arith.constant 0 : i32
    %c0_i32_1 = arith.constant 0 : i32
    return %c0_i32, %c0_i32_0 : i32, i32
  }
  func.func @transform_6(%arg0: i32) -> (i32, i32) {
    %c0_i32 = arith.constant 0 : i32
    %c0_i32_0 = arith.constant 0 : i32
    %c0_i32_1 = arith.constant 0 : i32
    return %c0_i32, %c0_i32_0 : i32, i32
  }
  func.func @transform_7(%arg0: i32) -> (i32, i32) {
    %c0_i32 = arith.constant 0 : i32
    %c0_i32_0 = arith.constant 0 : i32
    %c0_i32_1 = arith.constant 0 : i32
    return %c0_i32, %c0_i32_0 : i32, i32
  }
  func.func @transform_8(%arg0: i32) -> (i32, i32) {
    %c0_i32 = arith.constant 0 : i32
    %c0_i32_0 = arith.constant 0 : i32
    %c0_i32_1 = arith.constant 0 : i32
    return %c0_i32, %c0_i32_0 : i32, i32
  }
  func.func @transform_9(%arg0: i32) -> (i32, i32) {
    %c0_i32 = arith.constant 0 : i32
    %c0_i32_0 = arith.constant 0 : i32
    %c0_i32_1 = arith.constant 0 : i32
    return %c0_i32, %c0_i32_0 : i32, i32
  }
  func.func @transform_10(%arg0: i32) -> (i32, i32) {
    %c0_i32 = arith.constant 0 : i32
    %c0_i32_0 = arith.constant 0 : i32
    %c0_i32_1 = arith.constant 0 : i32
    return %c0_i32, %c0_i32_0 : i32, i32
  }
  func.func @transform_11(%arg0: i32) -> (i32, i32) {
    %c0_i32 = arith.constant 0 : i32
    %c0_i32_0 = arith.constant 0 : i32
    %c0_i32_1 = arith.constant 0 : i32
    return %c0_i32, %c0_i32_0 : i32, i32
  }
  func.func @transform_12(%arg0: i32) -> (i32, i32, i32) {
    %c0_i32 = arith.constant 0 : i32
    %c0_i32_0 = arith.constant 0 : i32
    %c0_i32_1 = arith.constant 0 : i32
    return %arg0, %c0_i32, %c0_i32_0 : i32, i32, i32
  }
}

</mosaic_0001>

<llo_original>
// kernel: tile.18
$region0: #{tile.18}
  #allocation0 [shape = 's32[1]{0}', space=sflag, size = 0x4, scoped, tag = 'scoped memory for tile.18']
  %s0 = inlined_call_operand.vmem [shape: f32[16], index: 0, kind: input, shape index: {}]
  %s1 = inlined_call_operand.vmem [shape: f32[16,16], index: 1, kind: output, shape index: {}]
  // Predicated region
  $region2: #{tile.18} parent=0 // pred_check
    _
  $region3: #{tile.18} parent=0 // pred_check_branch
    %3 = sbr.rel (0) target = $region5
  $region4: #{tile.18} parent=0 // pred_region
    _
  $region5: #{tile.18} parent=0 // pred_fallthru
    _
  %v4 = vld [vmem:[%s0] ss:$0 sm:$0xff]
  %5 = vst [vmem:[%s1] sm:$0xff] %v4
  %s6 = scalar_lea.vmem %s1, 8
  %7 = vst [vmem:[%s6] sm:$0xff] %v4

// kernel: tile.19
$region0: #{tile.19}
  %s0 = inlined_call_operand.vmem [shape: f32[16,16], index: 0, kind: input, shape index: {}]
  %s1 = inlined_call_operand.vmem [shape: f32[1,256], index: 1, kind: output, shape index: {}]
  $region1: #{tile.19} parent=0
    #allocation0 [shape = 'u8[8192]{0}', space=vmem, size = 0x2000, scoped, tag = 'scoped mem for output reshape']
    %s2 = smov 3
    %v3 = vld [vmem:[%s0] ss:$8 sm:%s2]
    %vm4 = vcmask 130048
    %5 = vst.msk [vmem:[#allocation0] ss:$8 sm:$0x3] %vm4, %v3
    %s6 = scalar_lea.vmem %s0, 7
    %s7 = smov 3
    %v8 = vld [vmem:[%s6] ss:$8 sm:%s7]
    %9 = vrot.lane.b32.xlu0 %v8, 112
    %v10 = vpop.permute.xlu0 %9
    %vm11 = vcmask 1048448
    %12 = vst.msk [vmem:[#allocation0] ss:$8 sm:$0x3] %vm11, %v10
    %s13 = scalar_lea.vmem %s0, 6
    %s14 = smov 3
    %v15 = vld [vmem:[%s13] ss:$8 sm:%s14]
    %16 = vrot.lane.b32.xlu0 %v15, 96
    %v17 = vpop.permute.xlu0 %16
    %vm18 = vcmask 917248
    %19 = vst.msk [vmem:[#allocation0] ss:$8 sm:$0x3] %vm18, %v17
    %s20 = scalar_lea.vmem %s0, 5
    %s21 = smov 3
    %v22 = vld [vmem:[%s20] ss:$8 sm:%s21]
    %23 = vrot.lane.b32.xlu0 %v22, 80
    %v24 = vpop.permute.xlu0 %23
    %vm25 = vcmask 786048
    %26 = vst.msk [vmem:[#allocation0] ss:$8 sm:$0x3] %vm25, %v24
    %s27 = scalar_lea.vmem %s0, 4
    %s28 = smov 3
    %v29 = vld [vmem:[%s27] ss:$8 sm:%s28]
    %30 = vrot.lane.b32.xlu0 %v29, 64
    %v31 = vpop.permute.xlu0 %30
    %vm32 = vcmask 654848
    %33 = vst.msk [vmem:[#allocation0] ss:$8 sm:$0x3] %vm32, %v31
    %s34 = scalar_lea.vmem %s0, 3
    %s35 = smov 3
    %v36 = vld [vmem:[%s34] ss:$8 sm:%s35]
    %37 = vrot.lane.b32.xlu0 %v36, 48
    %v38 = vpop.permute.xlu0 %37
    %vm39 = vcmask 523648
    %40 = vst.msk [vmem:[#allocation0] ss:$8 sm:$0x3] %vm39, %v38
    %s41 = scalar_lea.vmem %s0, 2
    %s42 = smov 3
    %v43 = vld [vmem:[%s41] ss:$8 sm:%s42]
    %44 = vrot.lane.b32.xlu0 %v43, 32
    %v45 = vpop.permute.xlu0 %44
    %vm46 = vcmask 392448
    %47 = vst.msk [vmem:[#allocation0] ss:$8 sm:$0x3] %vm46, %v45
    %s48 = scalar_lea.vmem %s0, 1
    %s49 = smov 3
    %v50 = vld [vmem:[%s48] ss:$8 sm:%s49]
    %51 = vrot.lane.b32.xlu0 %v50, 16
    %v52 = vpop.permute.xlu0 %51
    %vm53 = vcmask 261248
    %54 = vst.msk [vmem:[#allocation0] ss:$8 sm:$0x3] %vm53, %v52
    %s56 = sshllo.u32 0, 1
    %v58 = vld [vmem:[#allocation0] sm:%s56]
    %s59 = sshllo.u32 0, 1
    %60 = vst [vmem:[%s1] sm:%s59] %v58
    %s61 = scalar_lea.vmem [#allocation0], 8
    %v62 = vld [vmem:[%s61] sm:%s56]
    %s63 = sshllo.u32 0, 1
    %s64 = scalar_lea.vmem %s1, 1
    %65 = vst [vmem:[%s64] sm:%s63] %v62

// kernel: tile.13
$region0: #{tile.13}
  #allocation0 [shape = 's32[1]{0}', space=sflag, size = 0x4, scoped, tag = 'scoped memory for tile.13']
  %s0 = inlined_call_operand.vmem [shape: f32[8], index: 0, kind: input, shape index: {}]
  %s1 = inlined_call_operand.vmem [shape: f32[16,8], index: 1, kind: output, shape index: {}]
  // Predicated region
  $region2: #{tile.13} parent=0 // pred_check
    _
  $region3: #{tile.13} parent=0 // pred_check_branch
    %3 = sbr.rel (0) target = $region5
  $region4: #{tile.13} parent=0 // pred_region
    _
  $region5: #{tile.13} parent=0 // pred_fallthru
    _
  %v4 = vld [vmem:[%s0] ss:$0 sm:$0xff]
  %5 = vst [vmem:[%s1] sm:$0xff] %v4
  %s6 = scalar_lea.vmem %s1, 8
  %7 = vst [vmem:[%s6] sm:$0xff] %v4

// kernel: tile.14
$region0: #{tile.14}
  %s0 = inlined_call_operand.vmem [shape: f32[16,8], index: 0, kind: input, shape index: {}]
  %s1 = inlined_call_operand.vmem [shape: f32[1,128], index: 1, kind: output, shape index: {}]
  $region1: #{tile.14} parent=0
    #allocation0 [shape = 'u8[4096]{0}', space=vmem, size = 0x1000, scoped, tag = 'scoped mem for output reshape']
    %v2 = vld [vmem:[%s0] sm:$0x1]
    %vm3 = vcmask 64512
    %4 = vst.msk [vmem:[#allocation0] sm:$0x1] %vm3, %v2
    %s5 = scalar_lea.vmem %s0, 15
    %v6 = vld [vmem:[%s5] sm:$0x1]
    %7 = vrot.lane.b32.xlu0 %v6, 120
    %v8 = vpop.permute.xlu0 %7
    %vm9 = vcmask 1048512
    %10 = vst.msk [vmem:[#allocation0] sm:$0x1] %vm9, %v8
    %s11 = scalar_lea.vmem %s0, 14
    %v12 = vld [vmem:[%s11] sm:$0x1]
    %13 = vrot.lane.b32.xlu0 %v12, 112
    %v14 = vpop.permute.xlu0 %13
    %vm15 = vcmask 982912
    %16 = vst.msk [vmem:[#allocation0] sm:$0x1] %vm15, %v14
    %s17 = scalar_lea.vmem %s0, 13
    %v18 = vld [vmem:[%s17] sm:$0x1]
    %19 = vrot.lane.b32.xlu0 %v18, 104
    %v20 = vpop.permute.xlu0 %19
    %vm21 = vcmask 917312
    %22 = vst.msk [vmem:[#allocation0] sm:$0x1] %vm21, %v20
    %s23 = scalar_lea.vmem %s0, 12
    %v24 = vld [vmem:[%s23] sm:$0x1]
    %25 = vrot.lane.b32.xlu0 %v24, 96
    %v26 = vpop.permute.xlu0 %25
    %vm27 = vcmask 851712
    %28 = vst.msk [vmem:[#allocation0] sm:$0x1] %vm27, %v26
    %s29 = scalar_lea.vmem %s0, 11
    %v30 = vld [vmem:[%s29] sm:$0x1]
    %31 = vrot.lane.b32.xlu0 %v30, 88
    %v32 = vpop.permute.xlu0 %31
    %vm33 = vcmask 786112
    %34 = vst.msk [vmem:[#allocation0] sm:$0x1] %vm33, %v32
    %s35 = scalar_lea.vmem %s0, 10
    %v36 = vld [vmem:[%s35] sm:$0x1]
    %37 = vrot.lane.b32.xlu0 %v36, 80
    %v38 = vpop.permute.xlu0 %37
    %vm39 = vcmask 720512
    %40 = vst.msk [vmem:[#allocation0] sm:$0x1] %vm39, %v38
    %s41 = scalar_lea.vmem %s0, 9
    %v42 = vld [vmem:[%s41] sm:$0x1]
    %43 = vrot.lane.b32.xlu0 %v42, 72
    %v44 = vpop.permute.xlu0 %43
    %vm45 = vcmask 654912
    %46 = vst.msk [vmem:[#allocation0] sm:$0x1] %vm45, %v44
    %s47 = scalar_lea.vmem %s0, 8
    %v48 = vld [vmem:[%s47] sm:$0x1]
    %49 = vrot.lane.b32.xlu0 %v48, 64
    %v50 = vpop.permute.xlu0 %49
    %vm51 = vcmask 589312
    %52 = vst.msk [vmem:[#allocation0] sm:$0x1] %vm51, %v50
    %s53 = scalar_lea.vmem %s0, 7
    %v54 = vld [vmem:[%s53] sm:$0x1]
    %55 = vrot.lane.b32.xlu0 %v54, 56
    %v56 = vpop.permute.xlu0 %55
    %vm57 = vcmask 523712
    %58 = vst.msk [vmem:[#allocation0] sm:$0x1] %vm57, %v56
    %s59 = scalar_lea.vmem %s0, 6
    %v60 = vld [vmem:[%s59] sm:$0x1]
    %61 = vrot.lane.b32.xlu0 %v60, 48
    %v62 = vpop.permute.xlu0 %61
    %vm63 = vcmask 458112
    %64 = vst.msk [vmem:[#allocation0] sm:$0x1] %vm63, %v62
    %s65 = scalar_lea.vmem %s0, 5
    %v66 = vld [vmem:[%s65] sm:$0x1]
    %67 = vrot.lane.b32.xlu0 %v66, 40
    %v68 = vpop.permute.xlu0 %67
    %vm69 = vcmask 392512
    %70 = vst.msk [vmem:[#allocation0] sm:$0x1] %vm69, %v68
    %s71 = scalar_lea.vmem %s0, 4
    %v72 = vld [vmem:[%s71] sm:$0x1]
    %73 = vrot.lane.b32.xlu0 %v72, 32
    %v74 = vpop.permute.xlu0 %73
    %vm75 = vcmask 326912
    %76 = vst.msk [vmem:[#allocation0] sm:$0x1] %vm75, %v74
    %s77 = scalar_lea.vmem %s0, 3
    %v78 = vld [vmem:[%s77] sm:$0x1]
    %79 = vrot.lane.b32.xlu0 %v78, 24
    %v80 = vpop.permute.xlu0 %79
    %vm81 = vcmask 261312
    %82 = vst.msk [vmem:[#allocation0] sm:$0x1] %vm81, %v80
    %s83 = scalar_lea.vmem %s0, 2
    %v84 = vld [vmem:[%s83] sm:$0x1]
    %85 = vrot.lane.b32.xlu0 %v84, 16
    %v86 = vpop.permute.xlu0 %85
    %vm87 = vcmask 195712
    %88 = vst.msk [vmem:[#allocation0] sm:$0x1] %vm87, %v86
    %s89 = scalar_lea.vmem %s0, 1
    %v90 = vld [vmem:[%s89] sm:$0x1]
    %91 = vrot.lane.b32.xlu0 %v90, 8
    %v92 = vpop.permute.xlu0 %91
    %vm93 = vcmask 130112
    %94 = vst.msk [vmem:[#allocation0] sm:$0x1] %vm93, %v92
    %s96 = sshllo.u32 0, 1
    %v98 = vld [vmem:[#allocation0] sm:%s96]
    %s99 = sshllo.u32 0, 1
    %100 = vst [vmem:[%s1] sm:%s99] %v98

// kernel: full_model_forward.1
$region0: #{full_model_forward.1}
  #allocation0 [shape = 'u32[]', space=smem, size = 0x4, offset = 0x4, fixed_abs, tag = 'smem constant byte address 0x4 - core index']
  #allocation1 [shape = 'u32[144,128]{1,0:T(1,128)}', space=vmem, size = 0x12000, scoped, tag = 'internal scratch']
  %s0 = inlined_call_operand.vmem [shape: f32[2,13,16], index: 0, kind: input, shape index: {}]
  %s1 = inlined_call_operand.vmem [shape: f32[5,16,128], index: 1, kind: input, shape index: {}]
  %s2 = inlined_call_operand.vmem [shape: f32[1,128], index: 2, kind: input, shape index: {}]
  %s3 = inlined_call_operand.vmem [shape: f32[5,128,256], index: 3, kind: input, shape index: {}]
  %s4 = inlined_call_operand.vmem [shape: f32[1,256], index: 4, kind: input, shape index: {}]
  %s5 = inlined_call_operand.vmem [shape: f32[1,4], index: 5, kind: input, shape index: {}]
  %s6 = inlined_call_operand.vmem [shape: f32[256,32], index: 6, kind: input, shape index: {}]
  %s7 = inlined_call_operand.vmem [shape: f32[1,32], index: 7, kind: input, shape index: {}]
  %s8 = inlined_call_operand.vmem [shape: f32[32,16], index: 8, kind: input, shape index: {}]
  %s9 = inlined_call_operand.vmem [shape: f32[1,16], index: 9, kind: input, shape index: {}]
  %s10 = inlined_call_operand.vmem [shape: f32[16,4], index: 10, kind: input, shape index: {}]
  %s11 = inlined_call_operand.vmem [shape: f32[1,4], index: 11, kind: input, shape index: {}]
  %s12 = inlined_call_operand.hbm [shape: f32[2,1,4], index: 12, kind: output, shape index: {}]
  %s13 = sld [smem:[#allocation0]]
  $region81: #{full_model_forward.1} parent=0
    _
  %s15 = ssub.s32 1, %s13
  %s16 = scalar_select 0, %s15, %s13
  $region1: #{full_model_forward.1} parent=0
    #allocation2 [shape = 'u8[1024]{0}', space=vmem, size = 0x400, scoped, tag = 'output window, operand 0']
    #allocation3 [shape = 's32[2]{0}', space=sflag, size = 0x8, scoped, tag = 'scoped memory for full_model_forward.1']
    %17 = vsyncpa [#allocation3], 0
    %s18 = scalar_lea.sflag [#allocation3], 1
    %19 = vsyncpa %s18, 0
    loop: start=0, step=1, limit=4
    $region2: #{full_model_forward.1} parent=1 // loop_pre_header
      _
    $region3: #{full_model_forward.1} parent=1 // loop_header
      %s21 = sphi 0, %s25
      %p22 = scmp.ge.s32.totalorder %s21, 4
      %s31 = sphi 0, %s33
      %s34 = sphi 0, %s31
      %s35 = sphi 0, %s34
      %s51 = sphi 0, %s35
      %s55 = sphi 0, %s55
      %s57 = sphi 0, %s55
      %s58 = sphi 0, %s57
      %s72 = sphi 0, %s58
      %s76 = sphi 0, %s76
      %s78 = sphi 0, %s76
      %s79 = sphi 0, %s78
      %s93 = sphi 0, %s79
      %s97 = sphi 0, %s97
      %s99 = sphi 0, %s97
      %s100 = sphi 0, %s99
      %s114 = sphi 0, %s100
      %s118 = sphi 0, %s118
      %s120 = sphi 0, %s118
      %s121 = sphi 0, %s120
      %s135 = sphi 0, %s121
      %s139 = sphi 0, %s139
      %s141 = sphi 0, %s139
      %s142 = sphi 0, %s141
      %s156 = sphi 0, %s142
      %s160 = sphi 0, %s160
      %s162 = sphi 0, %s160
      %s163 = sphi 0, %s162
      %s177 = sphi 0, %s163
      %s181 = sphi 0, %s181
      %s183 = sphi 0, %s181
      %s184 = sphi 0, %s183
      %s198 = sphi 0, %s184
      %s202 = sphi 0, %s202
      %s204 = sphi 0, %s202
      %s205 = sphi 0, %s204
      %s219 = sphi 0, %s205
      %s223 = sphi 0, %s223
      %s225 = sphi 0, %s223
      %s226 = sphi 0, %s225
      %s240 = sphi 0, %s226
      %s244 = sphi 0, %s244
      %s246 = sphi 0, %s244
      %s247 = sphi 0, %s246
      %s261 = sphi 0, %s247
      %s265 = sphi 0, %s265
      %s267 = sphi 0, %s265
      %s268 = sphi 0, %s267
      %s282 = sphi 0, %s268
      %s288 = sphi 0, %s290
      %s291 = sphi 0, %s288
      %s292 = sphi 0, %s291
      %s308 = sphi 0, %s292
    $region4: #{full_model_forward.1} parent=1 // loop_header_branch
      %24 = sbr.rel (%p22) target = $region8
    $region5: #{full_model_forward.1} parent=1 // loop_body
      %s26 = ssub.s32 %s21, 1
      %s27 = ssub.s32 %s21, 2
      %s28 = sadd.s32 %s21, 1
      %s29 = ssub.s32 %s21, %s28
      %p30 = scmp.eq.s32.totalorder %s29, 0
      %s32 = sadd.s32 %s31, 1
      %s33 = scalar_select %p30, %s31, %s32
      %p36 = pneg %p30
      %p37 = scmp.eq.s32.totalorder %s21, 1
      %p38 = por %p36, %p37
      %p39 = scmp.ne.s32.totalorder %s31, %s34
      %p40 = scmp.eq.s32.totalorder %s21, 0
      %p41 = por %p39, %p40
      %p42 = scmp.ne.s32.totalorder %s31, %s34
      %p43 = scmp.eq.s32.totalorder %s26, 1
      %p44 = por %p42, %p43
      %p45 = scmp.ne.s32.totalorder %s34, %s35
      %p46 = scmp.eq.s32.totalorder %s26, 0
      %p47 = por %p45, %p46
      %p48 = scmp.ne.s32.totalorder %s34, %s35
      %p49 = scmp.eq.s32.totalorder %s27, 1
      %p50 = por %p48, %p49
      %p52 = scmp.ne.s32.totalorder %s35, %s51
      %p53 = scmp.eq.s32.totalorder %s27, 0
      %p54 = por %p52, %p53
      %s56 = sadd.s32 %s55, 1
      %p59 = scmp.eq.s32.totalorder %s21, 1
      %p60 = scmp.ne.s32.totalorder %s55, %s57
      %p61 = scmp.eq.s32.totalorder %s21, 0
      %p62 = por %p60, %p61
      %p63 = scmp.ne.s32.totalorder %s55, %s57
      %p64 = scmp.eq.s32.totalorder %s26, 1
      %p65 = por %p63, %p64
      %p66 = scmp.ne.s32.totalorder %s57, %s58
      %p67 = scmp.eq.s32.totalorder %s26, 0
      %p68 = por %p66, %p67
      %p69 = scmp.ne.s32.totalorder %s57, %s58
      %p70 = scmp.eq.s32.totalorder %s27, 1
      %p71 = por %p69, %p70
      %p73 = scmp.ne.s32.totalorder %s58, %s72
      %p74 = scmp.eq.s32.totalorder %s27, 0
      %p75 = por %p73, %p74
      %s77 = sadd.s32 %s76, 1
      %p80 = scmp.eq.s32.totalorder %s21, 1
      %p81 = scmp.ne.s32.totalorder %s76, %s78
      %p82 = scmp.eq.s32.totalorder %s21, 0
      %p83 = por %p81, %p82
      %p84 = scmp.ne.s32.totalorder %s76, %s78
      %p85 = scmp.eq.s32.totalorder %s26, 1
      %p86 = por %p84, %p85
      %p87 = scmp.ne.s32.totalorder %s78, %s79
      %p88 = scmp.eq.s32.totalorder %s26, 0
      %p89 = por %p87, %p88
      %p90 = scmp.ne.s32.totalorder %s78, %s79
      %p91 = scmp.eq.s32.totalorder %s27, 1
      %p92 = por %p90, %p91
      %p94 = scmp.ne.s32.totalorder %s79, %s93
      %p95 = scmp.eq.s32.totalorder %s27, 0
      %p96 = por %p94, %p95
      %s98 = sadd.s32 %s97, 1
      %p101 = scmp.eq.s32.totalorder %s21, 1
      %p102 = scmp.ne.s32.totalorder %s97, %s99
      %p103 = scmp.eq.s32.totalorder %s21, 0
      %p104 = por %p102, %p103
      %p105 = scmp.ne.s32.totalorder %s97, %s99
      %p106 = scmp.eq.s32.totalorder %s26, 1
      %p107 = por %p105, %p106
      %p108 = scmp.ne.s32.totalorder %s99, %s100
      %p109 = scmp.eq.s32.totalorder %s26, 0
      %p110 = por %p108, %p109
      %p111 = scmp.ne.s32.totalorder %s99, %s100
      %p112 = scmp.eq.s32.totalorder %s27, 1
      %p113 = por %p111, %p112
      %p115 = scmp.ne.s32.totalorder %s100, %s114
      %p116 = scmp.eq.s32.totalorder %s27, 0
      %p117 = por %p115, %p116
      %s119 = sadd.s32 %s118, 1
      %p122 = scmp.eq.s32.totalorder %s21, 1
      %p123 = scmp.ne.s32.totalorder %s118, %s120
      %p124 = scmp.eq.s32.totalorder %s21, 0
      %p125 = por %p123, %p124
      %p126 = scmp.ne.s32.totalorder %s118, %s120
      %p127 = scmp.eq.s32.totalorder %s26, 1
      %p128 = por %p126, %p127
      %p129 = scmp.ne.s32.totalorder %s120, %s121
      %p130 = scmp.eq.s32.totalorder %s26, 0
      %p131 = por %p129, %p130
      %p132 = scmp.ne.s32.totalorder %s120, %s121
      %p133 = scmp.eq.s32.totalorder %s27, 1
      %p134 = por %p132, %p133
      %p136 = scmp.ne.s32.totalorder %s121, %s135
      %p137 = scmp.eq.s32.totalorder %s27, 0
      %p138 = por %p136, %p137
      %s140 = sadd.s32 %s139, 1
      %p143 = scmp.eq.s32.totalorder %s21, 1
      %p144 = scmp.ne.s32.totalorder %s139, %s141
      %p145 = scmp.eq.s32.totalorder %s21, 0
      %p146 = por %p144, %p145
      %p147 = scmp.ne.s32.totalorder %s139, %s141
      %p148 = scmp.eq.s32.totalorder %s26, 1
      %p149 = por %p147, %p148
      %p150 = scmp.ne.s32.totalorder %s141, %s142
      %p151 = scmp.eq.s32.totalorder %s26, 0
      %p152 = por %p150, %p151
      %p153 = scmp.ne.s32.totalorder %s141, %s142
      %p154 = scmp.eq.s32.totalorder %s27, 1
      %p155 = por %p153, %p154
      %p157 = scmp.ne.s32.totalorder %s142, %s156
      %p158 = scmp.eq.s32.totalorder %s27, 0
      %p159 = por %p157, %p158
      %s161 = sadd.s32 %s160, 1
      %p164 = scmp.eq.s32.totalorder %s21, 1
      %p165 = scmp.ne.s32.totalorder %s160, %s162
      %p166 = scmp.eq.s32.totalorder %s21, 0
      %p167 = por %p165, %p166
      %p168 = scmp.ne.s32.totalorder %s160, %s162
      %p169 = scmp.eq.s32.totalorder %s26, 1
      %p170 = por %p168, %p169
      %p171 = scmp.ne.s32.totalorder %s162, %s163
      %p172 = scmp.eq.s32.totalorder %s26, 0
      %p173 = por %p171, %p172
      %p174 = scmp.ne.s32.totalorder %s162, %s163
      %p175 = scmp.eq.s32.totalorder %s27, 1
      %p176 = por %p174, %p175
      %p178 = scmp.ne.s32.totalorder %s163, %s177
      %p179 = scmp.eq.s32.totalorder %s27, 0
      %p180 = por %p178, %p179
      %s182 = sadd.s32 %s181, 1
      %p185 = scmp.eq.s32.totalorder %s21, 1
      %p186 = scmp.ne.s32.totalorder %s181, %s183
      %p187 = scmp.eq.s32.totalorder %s21, 0
      %p188 = por %p186, %p187
      %p189 = scmp.ne.s32.totalorder %s181, %s183
      %p190 = scmp.eq.s32.totalorder %s26, 1
      %p191 = por %p189, %p190
      %p192 = scmp.ne.s32.totalorder %s183, %s184
      %p193 = scmp.eq.s32.totalorder %s26, 0
      %p194 = por %p192, %p193
      %p195 = scmp.ne.s32.totalorder %s183, %s184
      %p196 = scmp.eq.s32.totalorder %s27, 1
      %p197 = por %p195, %p196
      %p199 = scmp.ne.s32.totalorder %s184, %s198
      %p200 = scmp.eq.s32.totalorder %s27, 0
      %p201 = por %p199, %p200
      %s203 = sadd.s32 %s202, 1
      %p206 = scmp.eq.s32.totalorder %s21, 1
      %p207 = scmp.ne.s32.totalorder %s202, %s204
      %p208 = scmp.eq.s32.totalorder %s21, 0
      %p209 = por %p207, %p208
      %p210 = scmp.ne.s32.totalorder %s202, %s204
      %p211 = scmp.eq.s32.totalorder %s26, 1
      %p212 = por %p210, %p211
      %p213 = scmp.ne.s32.totalorder %s204, %s205
      %p214 = scmp.eq.s32.totalorder %s26, 0
      %p215 = por %p213, %p214
      %p216 = scmp.ne.s32.totalorder %s204, %s205
      %p217 = scmp.eq.s32.totalorder %s27, 1
      %p218 = por %p216, %p217
      %p220 = scmp.ne.s32.totalorder %s205, %s219
      %p221 = scmp.eq.s32.totalorder %s27, 0
      %p222 = por %p220, %p221
      %s224 = sadd.s32 %s223, 1
      %p227 = scmp.eq.s32.totalorder %s21, 1
      %p228 = scmp.ne.s32.totalorder %s223, %s225
      %p229 = scmp.eq.s32.totalorder %s21, 0
      %p230 = por %p228, %p229
      %p231 = scmp.ne.s32.totalorder %s223, %s225
      %p232 = scmp.eq.s32.totalorder %s26, 1
      %p233 = por %p231, %p232
      %p234 = scmp.ne.s32.totalorder %s225, %s226
      %p235 = scmp.eq.s32.totalorder %s26, 0
      %p236 = por %p234, %p235
      %p237 = scmp.ne.s32.totalorder %s225, %s226
      %p238 = scmp.eq.s32.totalorder %s27, 1
      %p239 = por %p237, %p238
      %p241 = scmp.ne.s32.totalorder %s226, %s240
      %p242 = scmp.eq.s32.totalorder %s27, 0
      %p243 = por %p241, %p242
      %s245 = sadd.s32 %s244, 1
      %p248 = scmp.eq.s32.totalorder %s21, 1
      %p249 = scmp.ne.s32.totalorder %s244, %s246
      %p250 = scmp.eq.s32.totalorder %s21, 0
      %p251 = por %p249, %p250
      %p252 = scmp.ne.s32.totalorder %s244, %s246
      %p253 = scmp.eq.s32.totalorder %s26, 1
      %p254 = por %p252, %p253
      %p255 = scmp.ne.s32.totalorder %s246, %s247
      %p256 = scmp.eq.s32.totalorder %s26, 0
      %p257 = por %p255, %p256
      %p258 = scmp.ne.s32.totalorder %s246, %s247
      %p259 = scmp.eq.s32.totalorder %s27, 1
      %p260 = por %p258, %p259
      %p262 = scmp.ne.s32.totalorder %s247, %s261
      %p263 = scmp.eq.s32.totalorder %s27, 0
      %p264 = por %p262, %p263
      %s266 = sadd.s32 %s265, 1
      %p269 = scmp.eq.s32.totalorder %s21, 1
      %p270 = scmp.ne.s32.totalorder %s265, %s267
      %p271 = scmp.eq.s32.totalorder %s21, 0
      %p272 = por %p270, %p271
      %p273 = scmp.ne.s32.totalorder %s265, %s267
      %p274 = scmp.eq.s32.totalorder %s26, 1
      %p275 = por %p273, %p274
      %p276 = scmp.ne.s32.totalorder %s267, %s268
      %p277 = scmp.eq.s32.totalorder %s26, 0
      %p278 = por %p276, %p277
      %p279 = scmp.ne.s32.totalorder %s267, %s268
      %p280 = scmp.eq.s32.totalorder %s27, 1
      %p281 = por %p279, %p280
      %p283 = scmp.ne.s32.totalorder %s268, %s282
      %p284 = scmp.eq.s32.totalorder %s27, 0
      %p285 = por %p283, %p284
      %s286 = ssub.s32 %s21, %s28
      %p287 = scmp.eq.s32.totalorder %s286, 0
      %s289 = sadd.s32 %s288, 1
      %s290 = scalar_select %p287, %s288, %s289
      %p293 = pneg %p287
      %p294 = scmp.eq.s32.totalorder %s21, 1
      %p295 = por %p293, %p294
      %p296 = scmp.ne.s32.totalorder %s288, %s291
      %p297 = scmp.eq.s32.totalorder %s21, 0
      %p298 = por %p296, %p297
      %p299 = scmp.ne.s32.totalorder %s288, %s291
      %p300 = scmp.eq.s32.totalorder %s26, 1
      %p301 = por %p299, %p300
      %p302 = scmp.ne.s32.totalorder %s291, %s292
      %p303 = scmp.eq.s32.totalorder %s26, 0
      %p304 = por %p302, %p303
      %p305 = scmp.ne.s32.totalorder %s291, %s292
      %p306 = scmp.eq.s32.totalorder %s27, 1
      %p307 = por %p305, %p306
      %p309 = scmp.ne.s32.totalorder %s292, %s308
      %p310 = scmp.eq.s32.totalorder %s27, 0
      %p311 = por %p309, %p310
      %p312 = scmp.le.s32.totalorder 1, %s21
      %p313 = scmp.lt.s32.totalorder %s21, 3
      %p314 = pnand %p312, %p313
      %p315 = pneg %p314
      // Predicated region
      $region9: #{full_model_forward.1} parent=5 // pred_check
        _
      $region10: #{full_model_forward.1} parent=5 // pred_check_branch
        %317 = sbr.rel (%p314) target = $region12
      $region11: #{full_model_forward.1} parent=5 // pred_region
        %s318 = ssub.s32 %s21, 1
        // Predicated region
        $region13: #{full_model_forward.1} parent=11 // pred_check
          %p319 = pneg %p68
        $region14: #{full_model_forward.1} parent=11 // pred_check_branch
          %321 = sbr.rel (%p319) target = $region16
        $region15: #{full_model_forward.1} parent=11 // pred_region
          _
        $region16: #{full_model_forward.1} parent=11 // pred_fallthru
          _
        // Predicated region
        $region17: #{full_model_forward.1} parent=11 // pred_check
          %p322 = pneg %p89
        $region18: #{full_model_forward.1} parent=11 // pred_check_branch
          %324 = sbr.rel (%p322) target = $region20
        $region19: #{full_model_forward.1} parent=11 // pred_region
          _
        $region20: #{full_model_forward.1} parent=11 // pred_fallthru
          _
        // Predicated region
        $region21: #{full_model_forward.1} parent=11 // pred_check
          %p325 = pneg %p110
        $region22: #{full_model_forward.1} parent=11 // pred_check_branch
          %327 = sbr.rel (%p325) target = $region24
        $region23: #{full_model_forward.1} parent=11 // pred_region
          _
        $region24: #{full_model_forward.1} parent=11 // pred_fallthru
          _
        // Predicated region
        $region25: #{full_model_forward.1} parent=11 // pred_check
          %p328 = pneg %p131
        $region26: #{full_model_forward.1} parent=11 // pred_check_branch
          %330 = sbr.rel (%p328) target = $region28
        $region27: #{full_model_forward.1} parent=11 // pred_region
          _
        $region28: #{full_model_forward.1} parent=11 // pred_fallthru
          _
        // Predicated region
        $region29: #{full_model_forward.1} parent=11 // pred_check
          %p331 = pneg %p152
        $region30: #{full_model_forward.1} parent=11 // pred_check_branch
          %333 = sbr.rel (%p331) target = $region32
        $region31: #{full_model_forward.1} parent=11 // pred_region
          _
        $region32: #{full_model_forward.1} parent=11 // pred_fallthru
          _
        // Predicated region
        $region33: #{full_model_forward.1} parent=11 // pred_check
          %p334 = pneg %p173
        $region34: #{full_model_forward.1} parent=11 // pred_check_branch
          %336 = sbr.rel (%p334) target = $region36
        $region35: #{full_model_forward.1} parent=11 // pred_region
          _
        $region36: #{full_model_forward.1} parent=11 // pred_fallthru
          _
        // Predicated region
        $region37: #{full_model_forward.1} parent=11 // pred_check
          %p337 = pneg %p194
        $region38: #{full_model_forward.1} parent=11 // pred_check_branch
          %339 = sbr.rel (%p337) target = $region40
        $region39: #{full_model_forward.1} parent=11 // pred_region
          _
        $region40: #{full_model_forward.1} parent=11 // pred_fallthru
          _
        // Predicated region
        $region41: #{full_model_forward.1} parent=11 // pred_check
          %p340 = pneg %p215
        $region42: #{full_model_forward.1} parent=11 // pred_check_branch
          %342 = sbr.rel (%p340) target = $region44
        $region43: #{full_model_forward.1} parent=11 // pred_region
          _
        $region44: #{full_model_forward.1} parent=11 // pred_fallthru
          _
        // Predicated region
        $region45: #{full_model_forward.1} parent=11 // pred_check
          %p343 = pneg %p236
        $region46: #{full_model_forward.1} parent=11 // pred_check_branch
          %345 = sbr.rel (%p343) target = $region48
        $region47: #{full_model_forward.1} parent=11 // pred_region
          _
        $region48: #{full_model_forward.1} parent=11 // pred_fallthru
          _
        // Predicated region
        $region49: #{full_model_forward.1} parent=11 // pred_check
          %p346 = pneg %p257
        $region50: #{full_model_forward.1} parent=11 // pred_check_branch
          %348 = sbr.rel (%p346) target = $region52
        $region51: #{full_model_forward.1} parent=11 // pred_region
          _
        $region52: #{full_model_forward.1} parent=11 // pred_fallthru
          _
        // Predicated region
        $region53: #{full_model_forward.1} parent=11 // pred_check
          %p349 = pneg %p278
        $region54: #{full_model_forward.1} parent=11 // pred_check_branch
          %351 = sbr.rel (%p349) target = $region56
        $region55: #{full_model_forward.1} parent=11 // pred_region
          _
        $region56: #{full_model_forward.1} parent=11 // pred_fallthru
          _
      $region12: #{full_model_forward.1} parent=5 // pred_fallthru
        _
      %p352 = scmp.lt.s32.totalorder %s21, 2
      // Predicated region
      $region57: #{full_model_forward.1} parent=5 // pred_check
        %p353 = pneg %p352
      $region58: #{full_model_forward.1} parent=5 // pred_check_branch
        %355 = sbr.rel (%p353) target = $region60
      $region59: #{full_model_forward.1} parent=5 // pred_region
        // Predicated region
        $region61: #{full_model_forward.1} parent=59 // pred_check
          %p356 = pneg %p41
        $region62: #{full_model_forward.1} parent=59 // pred_check_branch
          %358 = sbr.rel (%p356) target = $region64
        $region63: #{full_model_forward.1} parent=59 // pred_region
          %p359 = scmp.lt.s32.totalorder %s21, 1
          %s360 = scalar_select %p359, %s21, 1
          %s361 = smul.addr %s360, 2
          %s362 = smul.addr %s361, 8
          %s363 = scalar_lea.vmem %s0, %s362
        $region64: #{full_model_forward.1} parent=59 // pred_fallthru
          _
      $region60: #{full_model_forward.1} parent=5 // pred_fallthru
        _
      %p364 = scmp.le.s32.totalorder 1, %s21
      %p365 = scmp.lt.s32.totalorder %s21, 3
      %p366 = pnand %p364, %p365
      %p367 = pneg %p366
      // Predicated region
      $region65: #{full_model_forward.1} parent=5 // pred_check
        _
      $region66: #{full_model_forward.1} parent=5 // pred_check_branch
        %369 = sbr.rel (%p366) target = $region68
      $region67: #{full_model_forward.1} parent=5 // pred_region
        %s370 = ssub.s32 %s21, 1
        %p371 = scmp.lt.s32.totalorder %s26, 1
        %s372 = scalar_select %p371, %s26, 1
        %s373 = smul.addr %s372, 2
        %s374 = smul.addr %s373, 8
        %s375 = scalar_lea.vmem %s0, %s374
        %p376 = pneg %p47
        %p377 = pneg %p44
        %p378 = pneg %p68
        %p379 = pneg %p65
        %p380 = pneg %p89
        %p381 = pneg %p86
        %p382 = pneg %p110
        %p383 = pneg %p107
        %p384 = pneg %p131
        %p385 = pneg %p128
        %p386 = pneg %p152
        %p387 = pneg %p149
        %p388 = pneg %p173
        %p389 = pneg %p170
        %p390 = pneg %p194
        %p391 = pneg %p191
        %p392 = pneg %p215
        %p393 = pneg %p212
        %p394 = pneg %p236
        %p395 = pneg %p233
        %p396 = pneg %p257
        %p397 = pneg %p254
        %p398 = pneg %p278
        %p399 = pneg %p275
        %p400 = pneg %p304
        %p401 = pneg %p301
        %s402 = sand.u32 %s291, 1
        %s403 = scalar_lea.sflag [#allocation3], %s402
        %s404 = sand.u32 %s291, 1
        %s405 = scalar_lea.vmem [#allocation2], %s404
        %p406 = scmp.lt.s32.totalorder %s26, 1
        %s407 = scalar_select %p406, %s26, 1
        %s408 = smul.addr %s407, 2
        %s409 = smul.addr %s408, 8
        %s410 = scalar_lea.vmem %s0, %s409
        %v411 = vld [vmem:[%s410] sm:$0xff]
        %v412 = vld [vmem:[%s410 + $0x8] sm:$0x1]
        %v413 = vld [vmem:[%s1] sm:$0xff]
        %v414 = vld [vmem:[%s1 + $0x8] sm:$0xff]
        %v415 = vld [vmem:[%s410 + $0x1] sm:$0xff]
        %v416 = vld [vmem:[%s410 + $0x9] sm:$0x1]
        %s417 = scalar_lea.vmem %s1, 16
        %v418 = vld [vmem:[%s417] sm:$0xff]
        %v419 = vld [vmem:[%s417 + $0x8] sm:$0xff]
        %vm420 = vcmask 130048
        %v422 = vsel %vm420, %v415, 0
        %v425 = vsel %vm420, %v416, 0
        %427 = vmatprep.subr.mxu0 0.0
        %428 = vmatpush1.msra.mxu0 %v418
        %429 = vmatprep.subr.mxu0 0.0
        %430 = vmatpush1.msra.mxu0 %v419
        %431 = vmatprep.subr.mxu0 0.0
        %432 = vmatpush1.msra.mxu0 0.0
        %433 = vmatprep.subr.mxu0 0.0
        %434 = vmatpush1.msra.mxu0 0.0
        %435 = vmatprep.subr.mxu0 0.0
        %436 = vmatpush1.msra.mxu0 0.0
        %437 = vmatprep.subr.mxu0 0.0
        %438 = vmatpush1.msra.mxu0 0.0
        %439 = vmatprep.subr.mxu0 0.0
        %440 = vmatpush1.msra.mxu0 0.0
        %441 = vmatprep.subr.mxu0 0.0
        %442 = vmatpush1.msra.mxu0 0.0
        %443 = vmatprep.subr.mxu0 0.0
        %444 = vmatpush1.msra.mxu0 0.0
        %445 = vmatprep.subr.mxu0 0.0
        %446 = vmatpush1.msra.mxu0 0.0
        %447 = vmatprep.subr.mxu0 0.0
        %448 = vmatpush1.msra.mxu0 0.0
        %449 = vmatprep.subr.mxu0 0.0
        %450 = vmatpush1.msra.mxu0 0.0
        %451 = vmatprep.subr.mxu0 0.0
        %452 = vmatpush1.msra.mxu0 0.0
        %453 = vmatprep.subr.mxu0 0.0
        %454 = vmatpush1.msra.mxu0 0.0
        %455 = vmatprep.subr.mxu0 0.0
        %456 = vmatpush1.msra.mxu0 0.0
        %457 = vmatprep.subr.mxu0 0.0
        %458 = vmatpush1.msra.mxu0 0.0
        %459 = vmatprep.subr.mxu0 0.0
        %460 = vmatpush1.msra.mxu0 0.0
        %461 = vmatprep.subr.mxu0 0.0
        %462 = vmatpush1.msra.mxu0 0.0
        %463 = vmatprep.subr.mxu0 0.0
        %464 = vmatpush1.msra.mxu0 0.0
        %465 = vmatprep.subr.mxu0 0.0
        %466 = vmatpush1.msra.mxu0 0.0
        %467 = vmatprep.subr.mxu0 0.0
        %468 = vmatpush1.msra.mxu0 0.0
        %469 = vmatprep.subr.mxu0 0.0
        %470 = vmatpush1.msra.mxu0 0.0
        %471 = vmatprep.subr.mxu0 0.0
        %472 = vmatpush1.msra.mxu0 0.0
        %473 = vmatprep.subr.mxu0 0.0
        %474 = vmatpush1.msra.mxu0 0.0
        %475 = vmatprep.subr.mxu0 0.0
        %476 = vmatpush1.msra.mxu0 0.0
        %477 = vmatprep.subr.mxu0 0.0
        %478 = vmatpush1.msra.mxu0 0.0
        %479 = vmatprep.subr.mxu0 0.0
        %480 = vmatpush1.msra.mxu0 0.0
        %481 = vmatprep.subr.mxu0 0.0
        %482 = vmatpush1.msra.mxu0 0.0
        %483 = vmatprep.subr.mxu0 0.0
        %484 = vmatpush1.msra.mxu0 0.0
        %485 = vmatprep.subr.mxu0 0.0
        %486 = vmatpush1.msra.mxu0 0.0
        %487 = vmatprep.subr.mxu0 0.0
        %488 = vmatpush1.msra.mxu0 0.0
        %489 = vmatprep.subr.mxu0 0.0
        %490 = vmatpush1.msra.mxu0 0.0
        %491 = vmatprep.mubr.f32.mxu0 0.0
        %492 = vmatmul.mubr.f32.gmra.mrb[0].mxu0 %v422
        %v493 = vpop.f32.mrb[0].mxu0
        %v494 = vadd.f32 0.0, %v493
        %v495 = vpop.f32.mrb[0].mxu0
        %496 = vmatprep.mubr.f32.mxu0 0.0
        %497 = vmatmul.mubr.f32.gmra.mrb[0].mxu0 %v425
        %v498 = vpop.f32.mrb[0].mxu0
        %v499 = vadd.f32 0.0, %v498
        %v500 = vpop.f32.mrb[0].mxu0
        %501 = vdwg.mxu0
        %v503 = vsel %vm420, %v411, 0
        %v506 = vsel %vm420, %v412, 0
        %508 = vmatprep.subr.mxu0 0.0
        %509 = vmatpush1.msra.mxu0 %v413
        %510 = vmatprep.subr.mxu0 0.0
        %511 = vmatpush1.msra.mxu0 %v414
        %512 = vmatprep.subr.mxu0 0.0
        %513 = vmatpush1.msra.mxu0 0.0
        %514 = vmatprep.subr.mxu0 0.0
        %515 = vmatpush1.msra.mxu0 0.0
        %516 = vmatprep.subr.mxu0 0.0
        %517 = vmatpush1.msra.mxu0 0.0
        %518 = vmatprep.subr.mxu0 0.0
        %519 = vmatpush1.msra.mxu0 0.0
        %520 = vmatprep.subr.mxu0 0.0
        %521 = vmatpush1.msra.mxu0 0.0
        %522 = vmatprep.subr.mxu0 0.0
        %523 = vmatpush1.msra.mxu0 0.0
        %524 = vmatprep.subr.mxu0 0.0
        %525 = vmatpush1.msra.mxu0 0.0
        %526 = vmatprep.subr.mxu0 0.0
        %527 = vmatpush1.msra.mxu0 0.0
        %528 = vmatprep.subr.mxu0 0.0
        %529 = vmatpush1.msra.mxu0 0.0
        %530 = vmatprep.subr.mxu0 0.0
        %531 = vmatpush1.msra.mxu0 0.0
        %532 = vmatprep.subr.mxu0 0.0
        %533 = vmatpush1.msra.mxu0 0.0
        %534 = vmatprep.subr.mxu0 0.0
        %535 = vmatpush1.msra.mxu0 0.0
        %536 = vmatprep.subr.mxu0 0.0
        %537 = vmatpush1.msra.mxu0 0.0
        %538 = vmatprep.subr.mxu0 0.0
        %539 = vmatpush1.msra.mxu0 0.0
        %540 = vmatprep.subr.mxu0 0.0
        %541 = vmatpush1.msra.mxu0 0.0
        %542 = vmatprep.subr.mxu0 0.0
        %543 = vmatpush1.msra.mxu0 0.0
        %544 = vmatprep.subr.mxu0 0.0
        %545 = vmatpush1.msra.mxu0 0.0
        %546 = vmatprep.subr.mxu0 0.0
        %547 = vmatpush1.msra.mxu0 0.0
        %548 = vmatprep.subr.mxu0 0.0
        %549 = vmatpush1.msra.mxu0 0.0
        %550 = vmatprep.subr.mxu0 0.0
        %551 = vmatpush1.msra.mxu0 0.0
        %552 = vmatprep.subr.mxu0 0.0
        %553 = vmatpush1.msra.mxu0 0.0
        %554 = vmatprep.subr.mxu0 0.0
        %555 = vmatpush1.msra.mxu0 0.0
        %556 = vmatprep.subr.mxu0 0.0
        %557 = vmatpush1.msra.mxu0 0.0
        %558 = vmatprep.subr.mxu0 0.0
        %559 = vmatpush1.msra.mxu0 0.0
        %560 = vmatprep.subr.mxu0 0.0
        %561 = vmatpush1.msra.mxu0 0.0
        %562 = vmatprep.subr.mxu0 0.0
        %563 = vmatpush1.msra.mxu0 0.0
        %564 = vmatprep.subr.mxu0 0.0
        %565 = vmatpush1.msra.mxu0 0.0
        %566 = vmatprep.subr.mxu0 0.0
        %567 = vmatpush1.msra.mxu0 0.0
        %568 = vmatprep.subr.mxu0 0.0
        %569 = vmatpush1.msra.mxu0 0.0
        %570 = vmatprep.subr.mxu0 0.0
        %571 = vmatpush1.msra.mxu0 0.0
        %572 = vmatprep.mubr.f32.mxu0 0.0
        %573 = vmatmul.mubr.f32.gmra.mrb[0].mxu0 %v503
        %v574 = vpop.f32.mrb[0].mxu0
        %v575 = vadd.f32 %v494, %v574
        %v576 = vpop.f32.mrb[0].mxu0
        %577 = vmatprep.mubr.f32.mxu0 0.0
        %578 = vmatmul.mubr.f32.gmra.mrb[0].mxu0 %v506
        %v579 = vpop.f32.mrb[0].mxu0
        %v580 = vadd.f32 %v499, %v579
        %v581 = vpop.f32.mrb[0].mxu0
        %582 = vdwg.mxu0
        %v583 = vld [vmem:[%s410 + $0x2] sm:$0xff]
        %v584 = vld [vmem:[%s410 + $0xa] sm:$0x1]
        %s585 = scalar_lea.vmem %s1, 32
        %v586 = vld [vmem:[%s585] sm:$0xff]
        %v587 = vld [vmem:[%s585 + $0x8] sm:$0xff]
        %v589 = vsel %vm420, %v583, 0
        %v592 = vsel %vm420, %v584, 0
        %594 = vmatprep.subr.mxu0 0.0
        %595 = vmatpush1.msra.mxu0 %v586
        %596 = vmatprep.subr.mxu0 0.0
        %597 = vmatpush1.msra.mxu0 %v587
        %598 = vmatprep.subr.mxu0 0.0
        %599 = vmatpush1.msra.mxu0 0.0
        %600 = vmatprep.subr.mxu0 0.0
        %601 = vmatpush1.msra.mxu0 0.0
        %602 = vmatprep.subr.mxu0 0.0
        %603 = vmatpush1.msra.mxu0 0.0
        %604 = vmatprep.subr.mxu0 0.0
        %605 = vmatpush1.msra.mxu0 0.0
        %606 = vmatprep.subr.mxu0 0.0
        %607 = vmatpush1.msra.mxu0 0.0
        %608 = vmatprep.subr.mxu0 0.0
        %609 = vmatpush1.msra.mxu0 0.0
        %610 = vmatprep.subr.mxu0 0.0
        %611 = vmatpush1.msra.mxu0 0.0
        %612 = vmatprep.subr.mxu0 0.0
        %613 = vmatpush1.msra.mxu0 0.0
        %614 = vmatprep.subr.mxu0 0.0
        %615 = vmatpush1.msra.mxu0 0.0
        %616 = vmatprep.subr.mxu0 0.0
        %617 = vmatpush1.msra.mxu0 0.0
        %618 = vmatprep.subr.mxu0 0.0
        %619 = vmatpush1.msra.mxu0 0.0
        %620 = vmatprep.subr.mxu0 0.0
        %621 = vmatpush1.msra.mxu0 0.0
        %622 = vmatprep.subr.mxu0 0.0
        %623 = vmatpush1.msra.mxu0 0.0
        %624 = vmatprep.subr.mxu0 0.0
        %625 = vmatpush1.msra.mxu0 0.0
        %626 = vmatprep.subr.mxu0 0.0
        %627 = vmatpush1.msra.mxu0 0.0
        %628 = vmatprep.subr.mxu0 0.0
        %629 = vmatpush1.msra.mxu0 0.0
        %630 = vmatprep.subr.mxu0 0.0
        %631 = vmatpush1.msra.mxu0 0.0
        %632 = vmatprep.subr.mxu0 0.0
        %633 = vmatpush1.msra.mxu0 0.0
        %634 = vmatprep.subr.mxu0 0.0
        %635 = vmatpush1.msra.mxu0 0.0
        %636 = vmatprep.subr.mxu0 0.0
        %637 = vmatpush1.msra.mxu0 0.0
        %638 = vmatprep.subr.mxu0 0.0
        %639 = vmatpush1.msra.mxu0 0.0
        %640 = vmatprep.subr.mxu0 0.0
        %641 = vmatpush1.msra.mxu0 0.0
        %642 = vmatprep.subr.mxu0 0.0
        %643 = vmatpush1.msra.mxu0 0.0
        %644 = vmatprep.subr.mxu0 0.0
        %645 = vmatpush1.msra.mxu0 0.0
        %646 = vmatprep.subr.mxu0 0.0
        %647 = vmatpush1.msra.mxu0 0.0
        %648 = vmatprep.subr.mxu0 0.0
        %649 = vmatpush1.msra.mxu0 0.0
        %650 = vmatprep.subr.mxu0 0.0
        %651 = vmatpush1.msra.mxu0 0.0
        %652 = vmatprep.subr.mxu0 0.0
        %653 = vmatpush1.msra.mxu0 0.0
        %654 = vmatprep.subr.mxu0 0.0
        %655 = vmatpush1.msra.mxu0 0.0
        %656 = vmatprep.subr.mxu0 0.0
        %657 = vmatpush1.msra.mxu0 0.0
        %658 = vmatprep.mubr.f32.mxu0 0.0
        %659 = vmatmul.mubr.f32.gmra.mrb[0].mxu0 %v589
        %v660 = vpop.f32.mrb[0].mxu0
        %v661 = vadd.f32 0.0, %v660
        %v662 = vpop.f32.mrb[0].mxu0
        %663 = vmatprep.mubr.f32.mxu0 0.0
        %664 = vmatmul.mubr.f32.gmra.mrb[0].mxu0 %v592
        %v665 = vpop.f32.mrb[0].mxu0
        %v666 = vadd.f32 0.0, %v665
        %v667 = vpop.f32.mrb[0].mxu0
        %668 = vdwg.mxu0
        %v669 = vadd.f32 %v575, %v661
        %v670 = vadd.f32 %v580, %v666
        %v671 = vld [vmem:[%s410 + $0x3] sm:$0xff]
        %v672 = vld [vmem:[%s410 + $0xb] sm:$0x1]
        %s673 = scalar_lea.vmem %s1, 48
        %v674 = vld [vmem:[%s673] sm:$0xff]
        %v675 = vld [vmem:[%s673 + $0x8] sm:$0xff]
        %v677 = vsel %vm420, %v671, 0
        %v680 = vsel %vm420, %v672, 0
        %682 = vmatprep.subr.mxu0 0.0
        %683 = vmatpush1.msra.mxu0 %v674
        %684 = vmatprep.subr.mxu0 0.0
        %685 = vmatpush1.msra.mxu0 %v675
        %686 = vmatprep.subr.mxu0 0.0
        %687 = vmatpush1.msra.mxu0 0.0
        %688 = vmatprep.subr.mxu0 0.0
        %689 = vmatpush1.msra.mxu0 0.0
        %690 = vmatprep.subr.mxu0 0.0
        %691 = vmatpush1.msra.mxu0 0.0
        %692 = vmatprep.subr.mxu0 0.0
        %693 = vmatpush1.msra.mxu0 0.0
        %694 = vmatprep.subr.mxu0 0.0
        %695 = vmatpush1.msra.mxu0 0.0
        %696 = vmatprep.subr.mxu0 0.0
        %697 = vmatpush1.msra.mxu0 0.0
        %698 = vmatprep.subr.mxu0 0.0
        %699 = vmatpush1.msra.mxu0 0.0
        %700 = vmatprep.subr.mxu0 0.0
        %701 = vmatpush1.msra.mxu0 0.0
        %702 = vmatprep.subr.mxu0 0.0
        %703 = vmatpush1.msra.mxu0 0.0
        %704 = vmatprep.subr.mxu0 0.0
        %705 = vmatpush1.msra.mxu0 0.0
        %706 = vmatprep.subr.mxu0 0.0
        %707 = vmatpush1.msra.mxu0 0.0
        %708 = vmatprep.subr.mxu0 0.0
        %709 = vmatpush1.msra.mxu0 0.0
        %710 = vmatprep.subr.mxu0 0.0
        %711 = vmatpush1.msra.mxu0 0.0
        %712 = vmatprep.subr.mxu0 0.0
        %713 = vmatpush1.msra.mxu0 0.0
        %714 = vmatprep.subr.mxu0 0.0
        %715 = vmatpush1.msra.mxu0 0.0
        %716 = vmatprep.subr.mxu0 0.0
        %717 = vmatpush1.msra.mxu0 0.0
        %718 = vmatprep.subr.mxu0 0.0
        %719 = vmatpush1.msra.mxu0 0.0
        %720 = vmatprep.subr.mxu0 0.0
        %721 = vmatpush1.msra.mxu0 0.0
        %722 = vmatprep.subr.mxu0 0.0
        %723 = vmatpush1.msra.mxu0 0.0
        %724 = vmatprep.subr.mxu0 0.0
        %725 = vmatpush1.msra.mxu0 0.0
        %726 = vmatprep.subr.mxu0 0.0
        %727 = vmatpush1.msra.mxu0 0.0
        %728 = vmatprep.subr.mxu0 0.0
        %729 = vmatpush1.msra.mxu0 0.0
        %730 = vmatprep.subr.mxu0 0.0
        %731 = vmatpush1.msra.mxu0 0.0
        %732 = vmatprep.subr.mxu0 0.0
        %733 = vmatpush1.msra.mxu0 0.0
        %734 = vmatprep.subr.mxu0 0.0
        %735 = vmatpush1.msra.mxu0 0.0
        %736 = vmatprep.subr.mxu0 0.0
        %737 = vmatpush1.msra.mxu0 0.0
        %738 = vmatprep.subr.mxu0 0.0
        %739 = vmatpush1.msra.mxu0 0.0
        %740 = vmatprep.subr.mxu0 0.0
        %741 = vmatpush1.msra.mxu0 0.0
        %742 = vmatprep.subr.mxu0 0.0
        %743 = vmatpush1.msra.mxu0 0.0
        %744 = vmatprep.subr.mxu0 0.0
        %745 = vmatpush1.msra.mxu0 0.0
        %746 = vmatprep.mubr.f32.mxu0 0.0
        %747 = vmatmul.mubr.f32.gmra.mrb[0].mxu0 %v677
        %v748 = vpop.f32.mrb[0].mxu0
        %v749 = vadd.f32 0.0, %v748
        %v750 = vpop.f32.mrb[0].mxu0
        %751 = vmatprep.mubr.f32.mxu0 0.0
        %752 = vmatmul.mubr.f32.gmra.mrb[0].mxu0 %v680
        %v753 = vpop.f32.mrb[0].mxu0
        %v754 = vadd.f32 0.0, %v753
        %v755 = vpop.f32.mrb[0].mxu0
        %756 = vdwg.mxu0
        %v757 = vadd.f32 %v669, %v749
        %v758 = vadd.f32 %v670, %v754
        %v759 = vld [vmem:[%s410 + $0x4] sm:$0xff]
        %v760 = vld [vmem:[%s410 + $0xc] sm:$0x1]
        %s761 = scalar_lea.vmem %s1, 64
        %v762 = vld [vmem:[%s761] sm:$0xff]
        %v763 = vld [vmem:[%s761 + $0x8] sm:$0xff]
        %v765 = vsel %vm420, %v759, 0
        %v768 = vsel %vm420, %v760, 0
        %770 = vmatprep.subr.mxu0 0.0
        %771 = vmatpush1.msra.mxu0 %v762
        %772 = vmatprep.subr.mxu0 0.0
        %773 = vmatpush1.msra.mxu0 %v763
        %774 = vmatprep.subr.mxu0 0.0
        %775 = vmatpush1.msra.mxu0 0.0
        %776 = vmatprep.subr.mxu0 0.0
        %777 = vmatpush1.msra.mxu0 0.0
        %778 = vmatprep.subr.mxu0 0.0
        %779 = vmatpush1.msra.mxu0 0.0
        %780 = vmatprep.subr.mxu0 0.0
        %781 = vmatpush1.msra.mxu0 0.0
        %782 = vmatprep.subr.mxu0 0.0
        %783 = vmatpush1.msra.mxu0 0.0
        %784 = vmatprep.subr.mxu0 0.0
        %785 = vmatpush1.msra.mxu0 0.0
        %786 = vmatprep.subr.mxu0 0.0
        %787 = vmatpush1.msra.mxu0 0.0
        %788 = vmatprep.subr.mxu0 0.0
        %789 = vmatpush1.msra.mxu0 0.0
        %790 = vmatprep.subr.mxu0 0.0
        %791 = vmatpush1.msra.mxu0 0.0
        %792 = vmatprep.subr.mxu0 0.0
        %793 = vmatpush1.msra.mxu0 0.0
        %794 = vmatprep.subr.mxu0 0.0
        %795 = vmatpush1.msra.mxu0 0.0
        %796 = vmatprep.subr.mxu0 0.0
        %797 = vmatpush1.msra.mxu0 0.0
        %798 = vmatprep.subr.mxu0 0.0
        %799 = vmatpush1.msra.mxu0 0.0
        %800 = vmatprep.subr.mxu0 0.0
        %801 = vmatpush1.msra.mxu0 0.0
        %802 = vmatprep.subr.mxu0 0.0
        %803 = vmatpush1.msra.mxu0 0.0
        %804 = vmatprep.subr.mxu0 0.0
        %805 = vmatpush1.msra.mxu0 0.0
        %806 = vmatprep.subr.mxu0 0.0
        %807 = vmatpush1.msra.mxu0 0.0
        %808 = vmatprep.subr.mxu0 0.0
        %809 = vmatpush1.msra.mxu0 0.0
        %810 = vmatprep.subr.mxu0 0.0
        %811 = vmatpush1.msra.mxu0 0.0
        %812 = vmatprep.subr.mxu0 0.0
        %813 = vmatpush1.msra.mxu0 0.0
        %814 = vmatprep.subr.mxu0 0.0
        %815 = vmatpush1.msra.mxu0 0.0
        %816 = vmatprep.subr.mxu0 0.0
        %817 = vmatpush1.msra.mxu0 0.0
        %818 = vmatprep.subr.mxu0 0.0
        %819 = vmatpush1.msra.mxu0 0.0
        %820 = vmatprep.subr.mxu0 0.0
        %821 = vmatpush1.msra.mxu0 0.0
        %822 = vmatprep.subr.mxu0 0.0
        %823 = vmatpush1.msra.mxu0 0.0
        %824 = vmatprep.subr.mxu0 0.0
        %825 = vmatpush1.msra.mxu0 0.0
        %826 = vmatprep.subr.mxu0 0.0
        %827 = vmatpush1.msra.mxu0 0.0
        %828 = vmatprep.subr.mxu0 0.0
        %829 = vmatpush1.msra.mxu0 0.0
        %830 = vmatprep.subr.mxu0 0.0
        %831 = vmatpush1.msra.mxu0 0.0
        %832 = vmatprep.subr.mxu0 0.0
        %833 = vmatpush1.msra.mxu0 0.0
        %834 = vmatprep.mubr.f32.mxu0 0.0
        %835 = vmatmul.mubr.f32.gmra.mrb[0].mxu0 %v765
        %v836 = vpop.f32.mrb[0].mxu0
        %v837 = vadd.f32 0.0, %v836
        %v838 = vpop.f32.mrb[0].mxu0
        %839 = vmatprep.mubr.f32.mxu0 0.0
        %840 = vmatmul.mubr.f32.gmra.mrb[0].mxu0 %v768
        %v841 = vpop.f32.mrb[0].mxu0
        %v842 = vadd.f32 0.0, %v841
        %v843 = vpop.f32.mrb[0].mxu0
        %844 = vdwg.mxu0
        %v845 = vadd.f32 %v757, %v837
        %v846 = vadd.f32 %v758, %v842
        %v847 = vld [vmem:[%s2] sm:$0x1]
        %v849 = vlaneseq
        %v850 = vshrl.u32 %v849, 7
        %v851 = vsub.s32 0, %v850
        %v852 = vrot.slane %v847, %v851
        %v854 = vadd.f32 %v845, %v852
        %v855 = vadd.f32 %v846, %v852
        %v856 = vld [vmem:[%s5] sm:$0x1]
        %vm857 = vcmp.ge.f32.partialorder %v854, 0.0
        %vm858 = vcmp.ge.f32.partialorder %v855, 0.0
        %v860 = vlaneseq
        %v861 = vshrl.u32 %v860, 7
        %v862 = vsub.s32 0, %v861
        %v863 = vrot.slane %v856, %v862
        %864 = vset.pattern.permute.xlu0 0
        %865 = vperm.xlu0 %864, %v863
        %v866 = vpop.permute.xlu0 %865
        %v868 = vmul.f32 %v866, %v854
        %v869 = vmul.f32 %v866, %v855
        %v870 = vsel %vm857, %v854, %v868
        %v871 = vsel %vm858, %v855, %v869
        %v873 = vrot.slane %v870, 1
        %v875 = vmax.f32 %v870, %v873
        %v876 = vrot.slane %v870, 2
        %v878 = vmax.f32 %v875, %v876
        %v880 = vrot.slane %v871, 2
        %v882 = vmax.f32 %v875, %v880
        %v884 = vrot.slane %v878, 6
        %v887 = vrot.slane %v882, 2
        %vm889 = vcmask 1041408
        %v890 = vsel %vm889, 0.0, %v884
        %vm891 = vcmask 1042432
        %v892 = vsel %vm891, %v890, %v878
        %vm893 = vcmask 1043456
        %v894 = vsel %vm893, %v892, %v887
        %vm895 = vcmask 1044480
        %v896 = vsel %vm895, %v894, 0.0
        %v897 = vld [vmem:[%s3] sm:$0xff]
        %v898 = vld [vmem:[%s3 + $0x8] sm:$0xff]
        %v899 = vld [vmem:[%s3 + $0x10] sm:$0xff]
        %v900 = vld [vmem:[%s3 + $0x18] sm:$0xff]
        %v901 = vld [vmem:[%s3 + $0x20] sm:$0xff]
        %v902 = vld [vmem:[%s3 + $0x28] sm:$0xff]
        %v903 = vld [vmem:[%s3 + $0x30] sm:$0xff]
        %v904 = vld [vmem:[%s3 + $0x38] sm:$0xff]
        %v905 = vld [vmem:[%s3 + $0x40] sm:$0xff]
        %v906 = vld [vmem:[%s3 + $0x48] sm:$0xff]
        %v907 = vld [vmem:[%s3 + $0x50] sm:$0xff]
        %v908 = vld [vmem:[%s3 + $0x58] sm:$0xff]
        %v909 = vld [vmem:[%s3 + $0x60] sm:$0xff]
        %v910 = vld [vmem:[%s3 + $0x68] sm:$0xff]
        %v911 = vld [vmem:[%s3 + $0x70] sm:$0xff]
        %v912 = vld [vmem:[%s3 + $0x78] sm:$0xff]
        %v913 = vld [vmem:[%s3 + $0x80] sm:$0xff]
        %v914 = vld [vmem:[%s3 + $0x88] sm:$0xff]
        %v915 = vld [vmem:[%s3 + $0x90] sm:$0xff]
        %v916 = vld [vmem:[%s3 + $0x98] sm:$0xff]
        %v917 = vld [vmem:[%s3 + $0xa0] sm:$0xff]
        %v918 = vld [vmem:[%s3 + $0xa8] sm:$0xff]
        %v919 = vld [vmem:[%s3 + $0xb0] sm:$0xff]
        %v920 = vld [vmem:[%s3 + $0xb8] sm:$0xff]
        %v921 = vld [vmem:[%s3 + $0xc0] sm:$0xff]
        %v922 = vld [vmem:[%s3 + $0xc8] sm:$0xff]
        %v923 = vld [vmem:[%s3 + $0xd0] sm:$0xff]
        %v924 = vld [vmem:[%s3 + $0xd8] sm:$0xff]
        %v925 = vld [vmem:[%s3 + $0xe0] sm:$0xff]
        %v926 = vld [vmem:[%s3 + $0xe8] sm:$0xff]
        %v927 = vld [vmem:[%s3 + $0xf0] sm:$0xff]
        %v928 = vld [vmem:[%s3 + $0xf8] sm:$0xff]
        %s929 = scalar_lea.vmem %s3, 256
        %v930 = vld [vmem:[%s929] sm:$0xff]
        %v931 = vld [vmem:[%s929 + $0x8] sm:$0xff]
        %v932 = vld [vmem:[%s929 + $0x10] sm:$0xff]
        %v933 = vld [vmem:[%s929 + $0x18] sm:$0xff]
        %v934 = vld [vmem:[%s929 + $0x20] sm:$0xff]
        %v935 = vld [vmem:[%s929 + $0x28] sm:$0xff]
        %v936 = vld [vmem:[%s929 + $0x30] sm:$0xff]
        %v937 = vld [vmem:[%s929 + $0x38] sm:$0xff]
        %v938 = vld [vmem:[%s929 + $0x40] sm:$0xff]
        %v939 = vld [vmem:[%s929 + $0x48] sm:$0xff]
        %v940 = vld [vmem:[%s929 + $0x50] sm:$0xff]
        %v941 = vld [vmem:[%s929 + $0x58] sm:$0xff]
        %v942 = vld [vmem:[%s929 + $0x60] sm:$0xff]
        %v943 = vld [vmem:[%s929 + $0x68] sm:$0xff]
        %v944 = vld [vmem:[%s929 + $0x70] sm:$0xff]
        %v945 = vld [vmem:[%s929 + $0x78] sm:$0xff]
        %v946 = vld [vmem:[%s929 + $0x80] sm:$0xff]
        %v947 = vld [vmem:[%s929 + $0x88] sm:$0xff]
        %v948 = vld [vmem:[%s929 + $0x90] sm:$0xff]
        %v949 = vld [vmem:[%s929 + $0x98] sm:$0xff]
        %v950 = vld [vmem:[%s929 + $0xa0] sm:$0xff]
        %v951 = vld [vmem:[%s929 + $0xa8] sm:$0xff]
        %v952 = vld [vmem:[%s929 + $0xb0] sm:$0xff]
        %v953 = vld [vmem:[%s929 + $0xb8] sm:$0xff]
        %v954 = vld [vmem:[%s929 + $0xc0] sm:$0xff]
        %v955 = vld [vmem:[%s929 + $0xc8] sm:$0xff]
        %v956 = vld [vmem:[%s929 + $0xd0] sm:$0xff]
        %v957 = vld [vmem:[%s929 + $0xd8] sm:$0xff]
        %v958 = vld [vmem:[%s929 + $0xe0] sm:$0xff]
        %v959 = vld [vmem:[%s929 + $0xe8] sm:$0xff]
        %v960 = vld [vmem:[%s929 + $0xf0] sm:$0xff]
        %v961 = vld [vmem:[%s929 + $0xf8] sm:$0xff]
        %v963 = vrot.slane %v896, 1
        %965 = vmatprep.subr.mxu0 %v931
        %966 = vmatpush1.msra.mxu0 %v930
        %967 = vmatprep.subr.mxu0 %v933
        %968 = vmatpush1.msra.mxu0 %v932
        %969 = vmatprep.subr.mxu0 %v935
        %970 = vmatpush1.msra.mxu0 %v934
        %971 = vmatprep.subr.mxu0 %v937
        %972 = vmatpush1.msra.mxu0 %v936
        %973 = vmatprep.subr.mxu0 %v939
        %974 = vmatpush1.msra.mxu0 %v938
        %975 = vmatprep.subr.mxu0 %v941
        %976 = vmatpush1.msra.mxu0 %v940
        %977 = vmatprep.subr.mxu0 %v943
        %978 = vmatpush1.msra.mxu0 %v942
        %979 = vmatprep.subr.mxu0 %v945
        %980 = vmatpush1.msra.mxu0 %v944
        %981 = vmatprep.subr.mxu0 %v947
        %982 = vmatpush1.msra.mxu0 %v946
        %983 = vmatprep.subr.mxu0 %v949
        %984 = vmatpush1.msra.mxu0 %v948
        %985 = vmatprep.subr.mxu0 %v951
        %986 = vmatpush1.msra.mxu0 %v950
        %987 = vmatprep.subr.mxu0 %v953
        %988 = vmatpush1.msra.mxu0 %v952
        %989 = vmatprep.subr.mxu0 %v955
        %990 = vmatpush1.msra.mxu0 %v954
        %991 = vmatprep.subr.mxu0 %v957
        %992 = vmatpush1.msra.mxu0 %v956
        %993 = vmatprep.subr.mxu0 %v959
        %994 = vmatpush1.msra.mxu0 %v958
        %995 = vmatprep.subr.mxu0 %v961
        %996 = vmatpush1.msra.mxu0 %v960
        %997 = vmatprep.subr.mxu0 0.0
        %998 = vmatpush1.msra.mxu0 0.0
        %999 = vmatprep.subr.mxu0 0.0
        %1000 = vmatpush1.msra.mxu0 0.0
        %1001 = vmatprep.subr.mxu0 0.0
        %1002 = vmatpush1.msra.mxu0 0.0
        %1003 = vmatprep.subr.mxu0 0.0
        %1004 = vmatpush1.msra.mxu0 0.0
        %1005 = vmatprep.subr.mxu0 0.0
        %1006 = vmatpush1.msra.mxu0 0.0
        %1007 = vmatprep.subr.mxu0 0.0
        %1008 = vmatpush1.msra.mxu0 0.0
        %1009 = vmatprep.subr.mxu0 0.0
        %1010 = vmatpush1.msra.mxu0 0.0
        %1011 = vmatprep.subr.mxu0 0.0
        %1012 = vmatpush1.msra.mxu0 0.0
        %1013 = vmatprep.subr.mxu0 0.0
        %1014 = vmatpush1.msra.mxu0 0.0
        %1015 = vmatprep.subr.mxu0 0.0
        %1016 = vmatpush1.msra.mxu0 0.0
        %1017 = vmatprep.subr.mxu0 0.0
        %1018 = vmatpush1.msra.mxu0 0.0
        %1019 = vmatprep.subr.mxu0 0.0
        %1020 = vmatpush1.msra.mxu0 0.0
        %1021 = vmatprep.subr.mxu0 0.0
        %1022 = vmatpush1.msra.mxu0 0.0
        %1023 = vmatprep.subr.mxu0 0.0
        %1024 = vmatpush1.msra.mxu0 0.0
        %1025 = vmatprep.subr.mxu0 0.0
        %1026 = vmatpush1.msra.mxu0 0.0
        %1027 = vmatprep.subr.mxu0 0.0
        %1028 = vmatpush1.msra.mxu0 0.0
        %1029 = vmatprep.mubr.f32.mxu0 0.0
        %1030 = vmatmul.mubr.f32.gmra.mrb[0].mxu0 %v963
        %v1031 = vpop.f32.mrb[0].mxu0
        %v1032 = vadd.f32 0.0, %v1031
        %v1033 = vpop.f32.mrb[0].mxu0
        %v1034 = vadd.f32 0.0, %v1033
        %1035 = vdwg.mxu0
        %1036 = vmatprep.subr.mxu0 %v898
        %1037 = vmatpush1.msra.mxu0 %v897
        %1038 = vmatprep.subr.mxu0 %v900
        %1039 = vmatpush1.msra.mxu0 %v899
        %1040 = vmatprep.subr.mxu0 %v902
        %1041 = vmatpush1.msra.mxu0 %v901
        %1042 = vmatprep.subr.mxu0 %v904
        %1043 = vmatpush1.msra.mxu0 %v903
        %1044 = vmatprep.subr.mxu0 %v906
        %1045 = vmatpush1.msra.mxu0 %v905
        %1046 = vmatprep.subr.mxu0 %v908
        %1047 = vmatpush1.msra.mxu0 %v907
        %1048 = vmatprep.subr.mxu0 %v910
        %1049 = vmatpush1.msra.mxu0 %v909
        %1050 = vmatprep.subr.mxu0 %v912
        %1051 = vmatpush1.msra.mxu0 %v911
        %1052 = vmatprep.subr.mxu0 %v914
        %1053 = vmatpush1.msra.mxu0 %v913
        %1054 = vmatprep.subr.mxu0 %v916
        %1055 = vmatpush1.msra.mxu0 %v915
        %1056 = vmatprep.subr.mxu0 %v918
        %1057 = vmatpush1.msra.mxu0 %v917
        %1058 = vmatprep.subr.mxu0 %v920
        %1059 = vmatpush1.msra.mxu0 %v919
        %1060 = vmatprep.subr.mxu0 %v922
        %1061 = vmatpush1.msra.mxu0 %v921
        %1062 = vmatprep.subr.mxu0 %v924
        %1063 = vmatpush1.msra.mxu0 %v923
        %1064 = vmatprep.subr.mxu0 %v926
        %1065 = vmatpush1.msra.mxu0 %v925
        %1066 = vmatprep.subr.mxu0 %v928
        %1067 = vmatpush1.msra.mxu0 %v927
        %1068 = vmatprep.subr.mxu0 0.0
        %1069 = vmatpush1.msra.mxu0 0.0
        %1070 = vmatprep.subr.mxu0 0.0
        %1071 = vmatpush1.msra.mxu0 0.0
        %1072 = vmatprep.subr.mxu0 0.0
        %1073 = vmatpush1.msra.mxu0 0.0
        %1074 = vmatprep.subr.mxu0 0.0
        %1075 = vmatpush1.msra.mxu0 0.0
        %1076 = vmatprep.subr.mxu0 0.0
        %1077 = vmatpush1.msra.mxu0 0.0
        %1078 = vmatprep.subr.mxu0 0.0
        %1079 = vmatpush1.msra.mxu0 0.0
        %1080 = vmatprep.subr.mxu0 0.0
        %1081 = vmatpush1.msra.mxu0 0.0
        %1082 = vmatprep.subr.mxu0 0.0
        %1083 = vmatpush1.msra.mxu0 0.0
        %1084 = vmatprep.subr.mxu0 0.0
        %1085 = vmatpush1.msra.mxu0 0.0
        %1086 = vmatprep.subr.mxu0 0.0
        %1087 = vmatpush1.msra.mxu0 0.0
        %1088 = vmatprep.subr.mxu0 0.0
        %1089 = vmatpush1.msra.mxu0 0.0
        %1090 = vmatprep.subr.mxu0 0.0
        %1091 = vmatpush1.msra.mxu0 0.0
        %1092 = vmatprep.subr.mxu0 0.0
        %1093 = vmatpush1.msra.mxu0 0.0
        %1094 = vmatprep.subr.mxu0 0.0
        %1095 = vmatpush1.msra.mxu0 0.0
        %1096 = vmatprep.subr.mxu0 0.0
        %1097 = vmatpush1.msra.mxu0 0.0
        %1098 = vmatprep.subr.mxu0 0.0
        %1099 = vmatpush1.msra.mxu0 0.0
        %1100 = vmatprep.mubr.f32.mxu0 0.0
        %1101 = vmatmul.mubr.f32.gmra.mrb[0].mxu0 %v896
        %v1102 = vpop.f32.mrb[0].mxu0
        %v1103 = vadd.f32 %v1032, %v1102
        %v1104 = vpop.f32.mrb[0].mxu0
        %v1105 = vadd.f32 %v1034, %v1104
        %1106 = vdwg.mxu0
        %s1107 = scalar_lea.vmem %s3, 512
        %v1108 = vld [vmem:[%s1107] sm:$0xff]
        %v1109 = vld [vmem:[%s1107 + $0x8] sm:$0xff]
        %v1110 = vld [vmem:[%s1107 + $0x10] sm:$0xff]
        %v1111 = vld [vmem:[%s1107 + $0x18] sm:$0xff]
        %v1112 = vld [vmem:[%s1107 + $0x20] sm:$0xff]
        %v1113 = vld [vmem:[%s1107 + $0x28] sm:$0xff]
        %v1114 = vld [vmem:[%s1107 + $0x30] sm:$0xff]
        %v1115 = vld [vmem:[%s1107 + $0x38] sm:$0xff]
        %v1116 = vld [vmem:[%s1107 + $0x40] sm:$0xff]
        %v1117 = vld [vmem:[%s1107 + $0x48] sm:$0xff]
        %v1118 = vld [vmem:[%s1107 + $0x50] sm:$0xff]
        %v1119 = vld [vmem:[%s1107 + $0x58] sm:$0xff]
        %v1120 = vld [vmem:[%s1107 + $0x60] sm:$0xff]
        %v1121 = vld [vmem:[%s1107 + $0x68] sm:$0xff]
        %v1122 = vld [vmem:[%s1107 + $0x70] sm:$0xff]
        %v1123 = vld [vmem:[%s1107 + $0x78] sm:$0xff]
        %v1124 = vld [vmem:[%s1107 + $0x80] sm:$0xff]
        %v1125 = vld [vmem:[%s1107 + $0x88] sm:$0xff]
        %v1126 = vld [vmem:[%s1107 + $0x90] sm:$0xff]
        %v1127 = vld [vmem:[%s1107 + $0x98] sm:$0xff]
        %v1128 = vld [vmem:[%s1107 + $0xa0] sm:$0xff]
        %v1129 = vld [vmem:[%s1107 + $0xa8] sm:$0xff]
        %v1130 = vld [vmem:[%s1107 + $0xb0] sm:$0xff]
        %v1131 = vld [vmem:[%s1107 + $0xb8] sm:$0xff]
        %v1132 = vld [vmem:[%s1107 + $0xc0] sm:$0xff]
        %v1133 = vld [vmem:[%s1107 + $0xc8] sm:$0xff]
        %v1134 = vld [vmem:[%s1107 + $0xd0] sm:$0xff]
        %v1135 = vld [vmem:[%s1107 + $0xd8] sm:$0xff]
        %v1136 = vld [vmem:[%s1107 + $0xe0] sm:$0xff]
        %v1137 = vld [vmem:[%s1107 + $0xe8] sm:$0xff]
        %v1138 = vld [vmem:[%s1107 + $0xf0] sm:$0xff]
        %v1139 = vld [vmem:[%s1107 + $0xf8] sm:$0xff]
        %v1140 = vrot.slane %v896, 2
        %1142 = vmatprep.subr.mxu0 %v1109
        %1143 = vmatpush1.msra.mxu0 %v1108
        %1144 = vmatprep.subr.mxu0 %v1111
        %1145 = vmatpush1.msra.mxu0 %v1110
        %1146 = vmatprep.subr.mxu0 %v1113
        %1147 = vmatpush1.msra.mxu0 %v1112
        %1148 = vmatprep.subr.mxu0 %v1115
        %1149 = vmatpush1.msra.mxu0 %v1114
        %1150 = vmatprep.subr.mxu0 %v1117
        %1151 = vmatpush1.msra.mxu0 %v1116
        %1152 = vmatprep.subr.mxu0 %v1119
        %1153 = vmatpush1.msra.mxu0 %v1118
        %1154 = vmatprep.subr.mxu0 %v1121
        %1155 = vmatpush1.msra.mxu0 %v1120
        %1156 = vmatprep.subr.mxu0 %v1123
        %1157 = vmatpush1.msra.mxu0 %v1122
        %1158 = vmatprep.subr.mxu0 %v1125
        %1159 = vmatpush1.msra.mxu0 %v1124
        %1160 = vmatprep.subr.mxu0 %v1127
        %1161 = vmatpush1.msra.mxu0 %v1126
        %1162 = vmatprep.subr.mxu0 %v1129
        %1163 = vmatpush1.msra.mxu0 %v1128
        %1164 = vmatprep.subr.mxu0 %v1131
        %1165 = vmatpush1.msra.mxu0 %v1130
        %1166 = vmatprep.subr.mxu0 %v1133
        %1167 = vmatpush1.msra.mxu0 %v1132
        %1168 = vmatprep.subr.mxu0 %v1135
        %1169 = vmatpush1.msra.mxu0 %v1134
        %1170 = vmatprep.subr.mxu0 %v1137
        %1171 = vmatpush1.msra.mxu0 %v1136
        %1172 = vmatprep.subr.mxu0 %v1139
        %1173 = vmatpush1.msra.mxu0 %v1138
        %1174 = vmatprep.subr.mxu0 0.0
        %1175 = vmatpush1.msra.mxu0 0.0
        %1176 = vmatprep.subr.mxu0 0.0
        %1177 = vmatpush1.msra.mxu0 0.0
        %1178 = vmatprep.subr.mxu0 0.0
        %1179 = vmatpush1.msra.mxu0 0.0
        %1180 = vmatprep.subr.mxu0 0.0
        %1181 = vmatpush1.msra.mxu0 0.0
        %1182 = vmatprep.subr.mxu0 0.0
        %1183 = vmatpush1.msra.mxu0 0.0
        %1184 = vmatprep.subr.mxu0 0.0
        %1185 = vmatpush1.msra.mxu0 0.0
        %1186 = vmatprep.subr.mxu0 0.0
        %1187 = vmatpush1.msra.mxu0 0.0
        %1188 = vmatprep.subr.mxu0 0.0
        %1189 = vmatpush1.msra.mxu0 0.0
        %1190 = vmatprep.subr.mxu0 0.0
        %1191 = vmatpush1.msra.mxu0 0.0
        %1192 = vmatprep.subr.mxu0 0.0
        %1193 = vmatpush1.msra.mxu0 0.0
        %1194 = vmatprep.subr.mxu0 0.0
        %1195 = vmatpush1.msra.mxu0 0.0
        %1196 = vmatprep.subr.mxu0 0.0
        %1197 = vmatpush1.msra.mxu0 0.0
        %1198 = vmatprep.subr.mxu0 0.0
        %1199 = vmatpush1.msra.mxu0 0.0
        %1200 = vmatprep.subr.mxu0 0.0
        %1201 = vmatpush1.msra.mxu0 0.0
        %1202 = vmatprep.subr.mxu0 0.0
        %1203 = vmatpush1.msra.mxu0 0.0
        %1204 = vmatprep.subr.mxu0 0.0
        %1205 = vmatpush1.msra.mxu0 0.0
        %1206 = vmatprep.mubr.f32.mxu0 0.0
        %1207 = vmatmul.mubr.f32.gmra.mrb[0].mxu0 %v1140
        %v1208 = vpop.f32.mrb[0].mxu0
        %v1209 = vadd.f32 0.0, %v1208
        %v1210 = vpop.f32.mrb[0].mxu0
        %v1211 = vadd.f32 0.0, %v1210
        %1212 = vdwg.mxu0
        %v1213 = vadd.f32 %v1103, %v1209
        %v1214 = vadd.f32 %v1105, %v1211
        %s1215 = scalar_lea.vmem %s3, 768
        %v1216 = vld [vmem:[%s1215] sm:$0xff]
        %v1217 = vld [vmem:[%s1215 + $0x8] sm:$0xff]
        %v1218 = vld [vmem:[%s1215 + $0x10] sm:$0xff]
        %v1219 = vld [vmem:[%s1215 + $0x18] sm:$0xff]
        %v1220 = vld [vmem:[%s1215 + $0x20] sm:$0xff]
        %v1221 = vld [vmem:[%s1215 + $0x28] sm:$0xff]
        %v1222 = vld [vmem:[%s1215 + $0x30] sm:$0xff]
        %v1223 = vld [vmem:[%s1215 + $0x38] sm:$0xff]
        %v1224 = vld [vmem:[%s1215 + $0x40] sm:$0xff]
        %v1225 = vld [vmem:[%s1215 + $0x48] sm:$0xff]
        %v1226 = vld [vmem:[%s1215 + $0x50] sm:$0xff]
        %v1227 = vld [vmem:[%s1215 + $0x58] sm:$0xff]
        %v1228 = vld [vmem:[%s1215 + $0x60] sm:$0xff]
        %v1229 = vld [vmem:[%s1215 + $0x68] sm:$0xff]
        %v1230 = vld [vmem:[%s1215 + $0x70] sm:$0xff]
        %v1231 = vld [vmem:[%s1215 + $0x78] sm:$0xff]
        %v1232 = vld [vmem:[%s1215 + $0x80] sm:$0xff]
        %v1233 = vld [vmem:[%s1215 + $0x88] sm:$0xff]
        %v1234 = vld [vmem:[%s1215 + $0x90] sm:$0xff]
        %v1235 = vld [vmem:[%s1215 + $0x98] sm:$0xff]
        %v1236 = vld [vmem:[%s1215 + $0xa0] sm:$0xff]
        %v1237 = vld [vmem:[%s1215 + $0xa8] sm:$0xff]
        %v1238 = vld [vmem:[%s1215 + $0xb0] sm:$0xff]
        %v1239 = vld [vmem:[%s1215 + $0xb8] sm:$0xff]
        %v1240 = vld [vmem:[%s1215 + $0xc0] sm:$0xff]
        %v1241 = vld [vmem:[%s1215 + $0xc8] sm:$0xff]
        %v1242 = vld [vmem:[%s1215 + $0xd0] sm:$0xff]
        %v1243 = vld [vmem:[%s1215 + $0xd8] sm:$0xff]
        %v1244 = vld [vmem:[%s1215 + $0xe0] sm:$0xff]
        %v1245 = vld [vmem:[%s1215 + $0xe8] sm:$0xff]
        %v1246 = vld [vmem:[%s1215 + $0xf0] sm:$0xff]
        %v1247 = vld [vmem:[%s1215 + $0xf8] sm:$0xff]
        %v1248 = vrot.slane %v896, 3
        %1250 = vmatprep.subr.mxu0 %v1217
        %1251 = vmatpush1.msra.mxu0 %v1216
        %1252 = vmatprep.subr.mxu0 %v1219
        %1253 = vmatpush1.msra.mxu0 %v1218
        %1254 = vmatprep.subr.mxu0 %v1221
        %1255 = vmatpush1.msra.mxu0 %v1220
        %1256 = vmatprep.subr.mxu0 %v1223
        %1257 = vmatpush1.msra.mxu0 %v1222
        %1258 = vmatprep.subr.mxu0 %v1225
        %1259 = vmatpush1.msra.mxu0 %v1224
        %1260 = vmatprep.subr.mxu0 %v1227
        %1261 = vmatpush1.msra.mxu0 %v1226
        %1262 = vmatprep.subr.mxu0 %v1229
        %1263 = vmatpush1.msra.mxu0 %v1228
        %1264 = vmatprep.subr.mxu0 %v1231
        %1265 = vmatpush1.msra.mxu0 %v1230
        %1266 = vmatprep.subr.mxu0 %v1233
        %1267 = vmatpush1.msra.mxu0 %v1232
        %1268 = vmatprep.subr.mxu0 %v1235
        %1269 = vmatpush1.msra.mxu0 %v1234
        %1270 = vmatprep.subr.mxu0 %v1237
        %1271 = vmatpush1.msra.mxu0 %v1236
        %1272 = vmatprep.subr.mxu0 %v1239
        %1273 = vmatpush1.msra.mxu0 %v1238
        %1274 = vmatprep.subr.mxu0 %v1241
        %1275 = vmatpush1.msra.mxu0 %v1240
        %1276 = vmatprep.subr.mxu0 %v1243
        %1277 = vmatpush1.msra.mxu0 %v1242
        %1278 = vmatprep.subr.mxu0 %v1245
        %1279 = vmatpush1.msra.mxu0 %v1244
        %1280 = vmatprep.subr.mxu0 %v1247
        %1281 = vmatpush1.msra.mxu0 %v1246
        %1282 = vmatprep.subr.mxu0 0.0
        %1283 = vmatpush1.msra.mxu0 0.0
        %1284 = vmatprep.subr.mxu0 0.0
        %1285 = vmatpush1.msra.mxu0 0.0
        %1286 = vmatprep.subr.mxu0 0.0
        %1287 = vmatpush1.msra.mxu0 0.0
        %1288 = vmatprep.subr.mxu0 0.0
        %1289 = vmatpush1.msra.mxu0 0.0
        %1290 = vmatprep.subr.mxu0 0.0
        %1291 = vmatpush1.msra.mxu0 0.0
        %1292 = vmatprep.subr.mxu0 0.0
        %1293 = vmatpush1.msra.mxu0 0.0
        %1294 = vmatprep.subr.mxu0 0.0
        %1295 = vmatpush1.msra.mxu0 0.0
        %1296 = vmatprep.subr.mxu0 0.0
        %1297 = vmatpush1.msra.mxu0 0.0
        %1298 = vmatprep.subr.mxu0 0.0
        %1299 = vmatpush1.msra.mxu0 0.0
        %1300 = vmatprep.subr.mxu0 0.0
        %1301 = vmatpush1.msra.mxu0 0.0
        %1302 = vmatprep.subr.mxu0 0.0
        %1303 = vmatpush1.msra.mxu0 0.0
        %1304 = vmatprep.subr.mxu0 0.0
        %1305 = vmatpush1.msra.mxu0 0.0
        %1306 = vmatprep.subr.mxu0 0.0
        %1307 = vmatpush1.msra.mxu0 0.0
        %1308 = vmatprep.subr.mxu0 0.0
        %1309 = vmatpush1.msra.mxu0 0.0
        %1310 = vmatprep.subr.mxu0 0.0
        %1311 = vmatpush1.msra.mxu0 0.0
        %1312 = vmatprep.subr.mxu0 0.0
        %1313 = vmatpush1.msra.mxu0 0.0
        %1314 = vmatprep.mubr.f32.mxu0 0.0
        %1315 = vmatmul.mubr.f32.gmra.mrb[0].mxu0 %v1248
        %v1316 = vpop.f32.mrb[0].mxu0
        %v1317 = vadd.f32 0.0, %v1316
        %v1318 = vpop.f32.mrb[0].mxu0
        %v1319 = vadd.f32 0.0, %v1318
        %1320 = vdwg.mxu0
        %v1321 = vadd.f32 %v1213, %v1317
        %v1322 = vadd.f32 %v1214, %v1319
        %s1323 = scalar_lea.vmem %s3, 1024
        %v1324 = vld [vmem:[%s1323] sm:$0xff]
        %v1325 = vld [vmem:[%s1323 + $0x8] sm:$0xff]
        %v1326 = vld [vmem:[%s1323 + $0x10] sm:$0xff]
        %v1327 = vld [vmem:[%s1323 + $0x18] sm:$0xff]
        %v1328 = vld [vmem:[%s1323 + $0x20] sm:$0xff]
        %v1329 = vld [vmem:[%s1323 + $0x28] sm:$0xff]
        %v1330 = vld [vmem:[%s1323 + $0x30] sm:$0xff]
        %v1331 = vld [vmem:[%s1323 + $0x38] sm:$0xff]
        %v1332 = vld [vmem:[%s1323 + $0x40] sm:$0xff]
        %v1333 = vld [vmem:[%s1323 + $0x48] sm:$0xff]
        %v1334 = vld [vmem:[%s1323 + $0x50] sm:$0xff]
        %v1335 = vld [vmem:[%s1323 + $0x58] sm:$0xff]
        %v1336 = vld [vmem:[%s1323 + $0x60] sm:$0xff]
        %v1337 = vld [vmem:[%s1323 + $0x68] sm:$0xff]
        %v1338 = vld [vmem:[%s1323 + $0x70] sm:$0xff]
        %v1339 = vld [vmem:[%s1323 + $0x78] sm:$0xff]
        %v1340 = vld [vmem:[%s1323 + $0x80] sm:$0xff]
        %v1341 = vld [vmem:[%s1323 + $0x88] sm:$0xff]
        %v1342 = vld [vmem:[%s1323 + $0x90] sm:$0xff]
        %v1343 = vld [vmem:[%s1323 + $0x98] sm:$0xff]
        %v1344 = vld [vmem:[%s1323 + $0xa0] sm:$0xff]
        %v1345 = vld [vmem:[%s1323 + $0xa8] sm:$0xff]
        %v1346 = vld [vmem:[%s1323 + $0xb0] sm:$0xff]
        %v1347 = vld [vmem:[%s1323 + $0xb8] sm:$0xff]
        %v1348 = vld [vmem:[%s1323 + $0xc0] sm:$0xff]
        %v1349 = vld [vmem:[%s1323 + $0xc8] sm:$0xff]
        %v1350 = vld [vmem:[%s1323 + $0xd0] sm:$0xff]
        %v1351 = vld [vmem:[%s1323 + $0xd8] sm:$0xff]
        %v1352 = vld [vmem:[%s1323 + $0xe0] sm:$0xff]
        %v1353 = vld [vmem:[%s1323 + $0xe8] sm:$0xff]
        %v1354 = vld [vmem:[%s1323 + $0xf0] sm:$0xff]
        %v1355 = vld [vmem:[%s1323 + $0xf8] sm:$0xff]
        %v1356 = vrot.slane %v896, 4
        %1358 = vmatprep.subr.mxu0 %v1325
        %1359 = vmatpush1.msra.mxu0 %v1324
        %1360 = vmatprep.subr.mxu0 %v1327
        %1361 = vmatpush1.msra.mxu0 %v1326
        %1362 = vmatprep.subr.mxu0 %v1329
        %1363 = vmatpush1.msra.mxu0 %v1328
        %1364 = vmatprep.subr.mxu0 %v1331
        %1365 = vmatpush1.msra.mxu0 %v1330
        %1366 = vmatprep.subr.mxu0 %v1333
        %1367 = vmatpush1.msra.mxu0 %v1332
        %1368 = vmatprep.subr.mxu0 %v1335
        %1369 = vmatpush1.msra.mxu0 %v1334
        %1370 = vmatprep.subr.mxu0 %v1337
        %1371 = vmatpush1.msra.mxu0 %v1336
        %1372 = vmatprep.subr.mxu0 %v1339
        %1373 = vmatpush1.msra.mxu0 %v1338
        %1374 = vmatprep.subr.mxu0 %v1341
        %1375 = vmatpush1.msra.mxu0 %v1340
        %1376 = vmatprep.subr.mxu0 %v1343
        %1377 = vmatpush1.msra.mxu0 %v1342
        %1378 = vmatprep.subr.mxu0 %v1345
        %1379 = vmatpush1.msra.mxu0 %v1344
        %1380 = vmatprep.subr.mxu0 %v1347
        %1381 = vmatpush1.msra.mxu0 %v1346
        %1382 = vmatprep.subr.mxu0 %v1349
        %1383 = vmatpush1.msra.mxu0 %v1348
        %1384 = vmatprep.subr.mxu0 %v1351
        %1385 = vmatpush1.msra.mxu0 %v1350
        %1386 = vmatprep.subr.mxu0 %v1353
        %1387 = vmatpush1.msra.mxu0 %v1352
        %1388 = vmatprep.subr.mxu0 %v1355
        %1389 = vmatpush1.msra.mxu0 %v1354
        %1390 = vmatprep.subr.mxu0 0.0
        %1391 = vmatpush1.msra.mxu0 0.0
        %1392 = vmatprep.subr.mxu0 0.0
        %1393 = vmatpush1.msra.mxu0 0.0
        %1394 = vmatprep.subr.mxu0 0.0
        %1395 = vmatpush1.msra.mxu0 0.0
        %1396 = vmatprep.subr.mxu0 0.0
        %1397 = vmatpush1.msra.mxu0 0.0
        %1398 = vmatprep.subr.mxu0 0.0
        %1399 = vmatpush1.msra.mxu0 0.0
        %1400 = vmatprep.subr.mxu0 0.0
        %1401 = vmatpush1.msra.mxu0 0.0
        %1402 = vmatprep.subr.mxu0 0.0
        %1403 = vmatpush1.msra.mxu0 0.0
        %1404 = vmatprep.subr.mxu0 0.0
        %1405 = vmatpush1.msra.mxu0 0.0
        %1406 = vmatprep.subr.mxu0 0.0
        %1407 = vmatpush1.msra.mxu0 0.0
        %1408 = vmatprep.subr.mxu0 0.0
        %1409 = vmatpush1.msra.mxu0 0.0
        %1410 = vmatprep.subr.mxu0 0.0
        %1411 = vmatpush1.msra.mxu0 0.0
        %1412 = vmatprep.subr.mxu0 0.0
        %1413 = vmatpush1.msra.mxu0 0.0
        %1414 = vmatprep.subr.mxu0 0.0
        %1415 = vmatpush1.msra.mxu0 0.0
        %1416 = vmatprep.subr.mxu0 0.0
        %1417 = vmatpush1.msra.mxu0 0.0
        %1418 = vmatprep.subr.mxu0 0.0
        %1419 = vmatpush1.msra.mxu0 0.0
        %1420 = vmatprep.subr.mxu0 0.0
        %1421 = vmatpush1.msra.mxu0 0.0
        %1422 = vmatprep.mubr.f32.mxu0 0.0
        %1423 = vmatmul.mubr.f32.gmra.mrb[0].mxu0 %v1356
        %v1424 = vpop.f32.mrb[0].mxu0
        %v1425 = vadd.f32 0.0, %v1424
        %v1426 = vpop.f32.mrb[0].mxu0
        %v1427 = vadd.f32 0.0, %v1426
        %1428 = vdwg.mxu0
        %v1429 = vadd.f32 %v1321, %v1425
        %v1430 = vadd.f32 %v1322, %v1427
        %v1431 = vld [vmem:[%s4] sm:$0x3]
        %v1433 = vlaneseq
        %v1434 = vshrl.u32 %v1433, 7
        %v1435 = vsub.s32 0, %v1434
        %v1436 = vrot.slane %v1431, %v1435
        %v1437 = vlaneseq
        %v1438 = vshrl.u32 %v1437, 7
        %v1439 = vsub.s32 1, %v1438
        %v1440 = vrot.slane %v1431, %v1439
        %v1443 = vadd.f32 %v1429, %v1436
        %v1444 = vadd.f32 %v1430, %v1440
        %vm1445 = vcmp.ge.f32.partialorder %v1443, 0.0
        %vm1446 = vcmp.ge.f32.partialorder %v1444, 0.0
        %1447 = vset.pattern.permute.xlu0 1
        %1448 = vperm.xlu0 %1447, %v863
        %v1449 = vpop.permute.xlu0 %1448
        %v1451 = vmul.f32 %v1449, %v1443
        %v1452 = vmul.f32 %v1449, %v1444
        %v1453 = vsel %vm1445, %v1443, %v1451
        %v1454 = vsel %vm1446, %v1444, %v1452
        %v1457 = vrot.slane %v1453, 1
        %v1458 = vrot.slane %v1454, 1
        %v1461 = vmax.f32 %v1453, %v1457
        %v1462 = vmax.f32 %v1454, %v1458
        %v1463 = vrot.slane %v1453, 2
        %v1464 = vrot.slane %v1454, 2
        %v1467 = vmax.f32 %v1461, %v1463
        %v1468 = vmax.f32 %v1462, %v1464
        %v1469 = vld [vmem:[%s6] sm:$0xff]
        %v1470 = vld [vmem:[%s6 + $0x8] sm:$0xff]
        %v1471 = vld [vmem:[%s6 + $0x10] sm:$0xff]
        %v1472 = vld [vmem:[%s6 + $0x18] sm:$0xff]
        %v1473 = vld [vmem:[%s6 + $0x20] sm:$0xff]
        %v1474 = vld [vmem:[%s6 + $0x28] sm:$0xff]
        %v1475 = vld [vmem:[%s6 + $0x30] sm:$0xff]
        %v1476 = vld [vmem:[%s6 + $0x38] sm:$0xff]
        %v1477 = vld [vmem:[%s6 + $0x40] sm:$0xff]
        %v1478 = vld [vmem:[%s6 + $0x48] sm:$0xff]
        %v1479 = vld [vmem:[%s6 + $0x50] sm:$0xff]
        %v1480 = vld [vmem:[%s6 + $0x58] sm:$0xff]
        %v1481 = vld [vmem:[%s6 + $0x60] sm:$0xff]
        %v1482 = vld [vmem:[%s6 + $0x68] sm:$0xff]
        %v1483 = vld [vmem:[%s6 + $0x70] sm:$0xff]
        %v1484 = vld [vmem:[%s6 + $0x78] sm:$0xff]
        %v1485 = vld [vmem:[%s6 + $0x80] sm:$0xff]
        %v1486 = vld [vmem:[%s6 + $0x88] sm:$0xff]
        %v1487 = vld [vmem:[%s6 + $0x90] sm:$0xff]
        %v1488 = vld [vmem:[%s6 + $0x98] sm:$0xff]
        %v1489 = vld [vmem:[%s6 + $0xa0] sm:$0xff]
        %v1490 = vld [vmem:[%s6 + $0xa8] sm:$0xff]
        %v1491 = vld [vmem:[%s6 + $0xb0] sm:$0xff]
        %v1492 = vld [vmem:[%s6 + $0xb8] sm:$0xff]
        %v1493 = vld [vmem:[%s6 + $0xc0] sm:$0xff]
        %v1494 = vld [vmem:[%s6 + $0xc8] sm:$0xff]
        %v1495 = vld [vmem:[%s6 + $0xd0] sm:$0xff]
        %v1496 = vld [vmem:[%s6 + $0xd8] sm:$0xff]
        %v1497 = vld [vmem:[%s6 + $0xe0] sm:$0xff]
        %v1498 = vld [vmem:[%s6 + $0xe8] sm:$0xff]
        %v1499 = vld [vmem:[%s6 + $0xf0] sm:$0xff]
        %v1500 = vld [vmem:[%s6 + $0xf8] sm:$0xff]
        %v1501 = vld [vmem:[%s7] sm:$0x1]
        %1502 = vmatprep.subr.mxu0 0.0
        %1503 = vmatpush1.msra.mxu0 %v1469
        %1504 = vmatprep.subr.mxu0 0.0
        %1505 = vmatpush1.msra.mxu0 %v1470
        %1506 = vmatprep.subr.mxu0 0.0
        %1507 = vmatpush1.msra.mxu0 %v1471
        %1508 = vmatprep.subr.mxu0 0.0
        %1509 = vmatpush1.msra.mxu0 %v1472
        %1510 = vmatprep.subr.mxu0 0.0
        %1511 = vmatpush1.msra.mxu0 %v1473
        %1512 = vmatprep.subr.mxu0 0.0
        %1513 = vmatpush1.msra.mxu0 %v1474
        %1514 = vmatprep.subr.mxu0 0.0
        %1515 = vmatpush1.msra.mxu0 %v1475
        %1516 = vmatprep.subr.mxu0 0.0
        %1517 = vmatpush1.msra.mxu0 %v1476
        %1518 = vmatprep.subr.mxu0 0.0
        %1519 = vmatpush1.msra.mxu0 %v1477
        %1520 = vmatprep.subr.mxu0 0.0
        %1521 = vmatpush1.msra.mxu0 %v1478
        %1522 = vmatprep.subr.mxu0 0.0
        %1523 = vmatpush1.msra.mxu0 %v1479
        %1524 = vmatprep.subr.mxu0 0.0
        %1525 = vmatpush1.msra.mxu0 %v1480
        %1526 = vmatprep.subr.mxu0 0.0
        %1527 = vmatpush1.msra.mxu0 %v1481
        %1528 = vmatprep.subr.mxu0 0.0
        %1529 = vmatpush1.msra.mxu0 %v1482
        %1530 = vmatprep.subr.mxu0 0.0
        %1531 = vmatpush1.msra.mxu0 %v1483
        %1532 = vmatprep.subr.mxu0 0.0
        %1533 = vmatpush1.msra.mxu0 %v1484
        %1534 = vmatprep.subr.mxu0 0.0
        %1535 = vmatpush1.msra.mxu0 %v1485
        %1536 = vmatprep.subr.mxu0 0.0
        %1537 = vmatpush1.msra.mxu0 %v1486
        %1538 = vmatprep.subr.mxu0 0.0
        %1539 = vmatpush1.msra.mxu0 %v1487
        %1540 = vmatprep.subr.mxu0 0.0
        %1541 = vmatpush1.msra.mxu0 %v1488
        %1542 = vmatprep.subr.mxu0 0.0
        %1543 = vmatpush1.msra.mxu0 %v1489
        %1544 = vmatprep.subr.mxu0 0.0
        %1545 = vmatpush1.msra.mxu0 %v1490
        %1546 = vmatprep.subr.mxu0 0.0
        %1547 = vmatpush1.msra.mxu0 %v1491
        %1548 = vmatprep.subr.mxu0 0.0
        %1549 = vmatpush1.msra.mxu0 %v1492
        %1550 = vmatprep.subr.mxu0 0.0
        %1551 = vmatpush1.msra.mxu0 %v1493
        %1552 = vmatprep.subr.mxu0 0.0
        %1553 = vmatpush1.msra.mxu0 %v1494
        %1554 = vmatprep.subr.mxu0 0.0
        %1555 = vmatpush1.msra.mxu0 %v1495
        %1556 = vmatprep.subr.mxu0 0.0
        %1557 = vmatpush1.msra.mxu0 %v1496
        %1558 = vmatprep.subr.mxu0 0.0
        %1559 = vmatpush1.msra.mxu0 %v1497
        %1560 = vmatprep.subr.mxu0 0.0
        %1561 = vmatpush1.msra.mxu0 %v1498
        %1562 = vmatprep.subr.mxu0 0.0
        %1563 = vmatpush1.msra.mxu0 %v1499
        %1564 = vmatprep.subr.mxu0 0.0
        %1565 = vmatpush1.msra.mxu0 %v1500
        %1566 = vmatprep.mubr.f32.mxu0 %v1468
        %1567 = vmatmul.mubr.f32.gmra.mrb[0].mxu0 %v1467
        %v1568 = vpop.f32.mrb[0].mxu0
        %v1569 = vadd.f32 %v1501, %v1568
        %v1570 = vpop.f32.mrb[0].mxu0
        %1571 = vdwg.mxu0
        %vm1572 = vcmp.ge.f32.partialorder %v1569, 0.0
        %1573 = vset.pattern.permute.xlu0 2
        %1574 = vperm.xlu0 %1573, %v856
        %v1575 = vpop.permute.xlu0 %1574
        %v1577 = vlaneseq
        %v1578 = vshrl.u32 %v1577, 7
        %v1579 = vsub.s32 0, %v1578
        %v1580 = vrot.slane %v1575, %v1579
        %v1581 = vmul.f32 %v1580, %v1569
        %v1582 = vsel %vm1572, %v1569, %v1581
        %v1583 = vld [vmem:[%s8] sm:$0xff]
        %v1584 = vld [vmem:[%s8 + $0x8] sm:$0xff]
        %v1585 = vld [vmem:[%s8 + $0x10] sm:$0xff]
        %v1586 = vld [vmem:[%s8 + $0x18] sm:$0xff]
        %v1587 = vld [vmem:[%s9] sm:$0x1]
        %vm1588 = vcmask 261120
        %v1590 = vsel %vm1588, %v1582, 0
        %1592 = vmatprep.subr.mxu0 0.0
        %1593 = vmatpush1.msra.mxu0 %v1583
        %1594 = vmatprep.subr.mxu0 0.0
        %1595 = vmatpush1.msra.mxu0 %v1584
        %1596 = vmatprep.subr.mxu0 0.0
        %1597 = vmatpush1.msra.mxu0 %v1585
        %1598 = vmatprep.subr.mxu0 0.0
        %1599 = vmatpush1.msra.mxu0 %v1586
        %1600 = vmatprep.subr.mxu0 0.0
        %1601 = vmatpush1.msra.mxu0 0.0
        %1602 = vmatprep.subr.mxu0 0.0
        %1603 = vmatpush1.msra.mxu0 0.0
        %1604 = vmatprep.subr.mxu0 0.0
        %1605 = vmatpush1.msra.mxu0 0.0
        %1606 = vmatprep.subr.mxu0 0.0
        %1607 = vmatpush1.msra.mxu0 0.0
        %1608 = vmatprep.subr.mxu0 0.0
        %1609 = vmatpush1.msra.mxu0 0.0
        %1610 = vmatprep.subr.mxu0 0.0
        %1611 = vmatpush1.msra.mxu0 0.0
        %1612 = vmatprep.subr.mxu0 0.0
        %1613 = vmatpush1.msra.mxu0 0.0
        %1614 = vmatprep.subr.mxu0 0.0
        %1615 = vmatpush1.msra.mxu0 0.0
        %1616 = vmatprep.subr.mxu0 0.0
        %1617 = vmatpush1.msra.mxu0 0.0
        %1618 = vmatprep.subr.mxu0 0.0
        %1619 = vmatpush1.msra.mxu0 0.0
        %1620 = vmatprep.subr.mxu0 0.0
        %1621 = vmatpush1.msra.mxu0 0.0
        %1622 = vmatprep.subr.mxu0 0.0
        %1623 = vmatpush1.msra.mxu0 0.0
        %1624 = vmatprep.subr.mxu0 0.0
        %1625 = vmatpush1.msra.mxu0 0.0
        %1626 = vmatprep.subr.mxu0 0.0
        %1627 = vmatpush1.msra.mxu0 0.0
        %1628 = vmatprep.subr.mxu0 0.0
        %1629 = vmatpush1.msra.mxu0 0.0
        %1630 = vmatprep.subr.mxu0 0.0
        %1631 = vmatpush1.msra.mxu0 0.0
        %1632 = vmatprep.subr.mxu0 0.0
        %1633 = vmatpush1.msra.mxu0 0.0
        %1634 = vmatprep.subr.mxu0 0.0
        %1635 = vmatpush1.msra.mxu0 0.0
        %1636 = vmatprep.subr.mxu0 0.0
        %1637 = vmatpush1.msra.mxu0 0.0
        %1638 = vmatprep.subr.mxu0 0.0
        %1639 = vmatpush1.msra.mxu0 0.0
        %1640 = vmatprep.subr.mxu0 0.0
        %1641 = vmatpush1.msra.mxu0 0.0
        %1642 = vmatprep.subr.mxu0 0.0
        %1643 = vmatpush1.msra.mxu0 0.0
        %1644 = vmatprep.subr.mxu0 0.0
        %1645 = vmatpush1.msra.mxu0 0.0
        %1646 = vmatprep.subr.mxu0 0.0
        %1647 = vmatpush1.msra.mxu0 0.0
        %1648 = vmatprep.subr.mxu0 0.0
        %1649 = vmatpush1.msra.mxu0 0.0
        %1650 = vmatprep.subr.mxu0 0.0
        %1651 = vmatpush1.msra.mxu0 0.0
        %1652 = vmatprep.subr.mxu0 0.0
        %1653 = vmatpush1.msra.mxu0 0.0
        %1654 = vmatprep.subr.mxu0 0.0
        %1655 = vmatpush1.msra.mxu0 0.0
        %1656 = vmatprep.mubr.f32.mxu0 0.0
        %1657 = vmatmul.mubr.f32.gmra.mrb[0].mxu0 %v1590
        %v1658 = vpop.f32.mrb[0].mxu0
        %v1659 = vadd.f32 %v1587, %v1658
        %v1660 = vpop.f32.mrb[0].mxu0
        %1661 = vdwg.mxu0
        %vm1662 = vcmp.ge.f32.partialorder %v1659, 0.0
        %1663 = vset.pattern.permute.xlu0 3
        %1664 = vperm.xlu0 %1663, %v856
        %v1665 = vpop.permute.xlu0 %1664
        %v1667 = vlaneseq
        %v1668 = vshrl.u32 %v1667, 7
        %v1669 = vsub.s32 0, %v1668
        %v1670 = vrot.slane %v1665, %v1669
        %v1671 = vmul.f32 %v1670, %v1659
        %v1672 = vsel %vm1662, %v1659, %v1671
        %v1673 = vld [vmem:[%s10] sm:$0xff]
        %v1674 = vld [vmem:[%s10 + $0x8] sm:$0xff]
        %v1675 = vld [vmem:[%s11] sm:$0x1]
        %v1677 = vsel %vm420, %v1672, 0
        %1679 = vmatprep.subr.mxu0 0.0
        %1680 = vmatpush1.msra.mxu0 %v1673
        %1681 = vmatprep.subr.mxu0 0.0
        %1682 = vmatpush1.msra.mxu0 %v1674
        %1683 = vmatprep.subr.mxu0 0.0
        %1684 = vmatpush1.msra.mxu0 0.0
        %1685 = vmatprep.subr.mxu0 0.0
        %1686 = vmatpush1.msra.mxu0 0.0
        %1687 = vmatprep.subr.mxu0 0.0
        %1688 = vmatpush1.msra.mxu0 0.0
        %1689 = vmatprep.subr.mxu0 0.0
        %1690 = vmatpush1.msra.mxu0 0.0
        %1691 = vmatprep.subr.mxu0 0.0
        %1692 = vmatpush1.msra.mxu0 0.0
        %1693 = vmatprep.subr.mxu0 0.0
        %1694 = vmatpush1.msra.mxu0 0.0
        %1695 = vmatprep.subr.mxu0 0.0
        %1696 = vmatpush1.msra.mxu0 0.0
        %1697 = vmatprep.subr.mxu0 0.0
        %1698 = vmatpush1.msra.mxu0 0.0
        %1699 = vmatprep.subr.mxu0 0.0
        %1700 = vmatpush1.msra.mxu0 0.0
        %1701 = vmatprep.subr.mxu0 0.0
        %1702 = vmatpush1.msra.mxu0 0.0
        %1703 = vmatprep.subr.mxu0 0.0
        %1704 = vmatpush1.msra.mxu0 0.0
        %1705 = vmatprep.subr.mxu0 0.0
        %1706 = vmatpush1.msra.mxu0 0.0
        %1707 = vmatprep.subr.mxu0 0.0
        %1708 = vmatpush1.msra.mxu0 0.0
        %1709 = vmatprep.subr.mxu0 0.0
        %1710 = vmatpush1.msra.mxu0 0.0
        %1711 = vmatprep.subr.mxu0 0.0
        %1712 = vmatpush1.msra.mxu0 0.0
        %1713 = vmatprep.subr.mxu0 0.0
        %1714 = vmatpush1.msra.mxu0 0.0
        %1715 = vmatprep.subr.mxu0 0.0
        %1716 = vmatpush1.msra.mxu0 0.0
        %1717 = vmatprep.subr.mxu0 0.0
        %1718 = vmatpush1.msra.mxu0 0.0
        %1719 = vmatprep.subr.mxu0 0.0
        %1720 = vmatpush1.msra.mxu0 0.0
        %1721 = vmatprep.subr.mxu0 0.0
        %1722 = vmatpush1.msra.mxu0 0.0
        %1723 = vmatprep.subr.mxu0 0.0
        %1724 = vmatpush1.msra.mxu0 0.0
        %1725 = vmatprep.subr.mxu0 0.0
        %1726 = vmatpush1.msra.mxu0 0.0
        %1727 = vmatprep.subr.mxu0 0.0
        %1728 = vmatpush1.msra.mxu0 0.0
        %1729 = vmatprep.subr.mxu0 0.0
        %1730 = vmatpush1.msra.mxu0 0.0
        %1731 = vmatprep.subr.mxu0 0.0
        %1732 = vmatpush1.msra.mxu0 0.0
        %1733 = vmatprep.subr.mxu0 0.0
        %1734 = vmatpush1.msra.mxu0 0.0
        %1735 = vmatprep.subr.mxu0 0.0
        %1736 = vmatpush1.msra.mxu0 0.0
        %1737 = vmatprep.subr.mxu0 0.0
        %1738 = vmatpush1.msra.mxu0 0.0
        %1739 = vmatprep.subr.mxu0 0.0
        %1740 = vmatpush1.msra.mxu0 0.0
        %1741 = vmatprep.subr.mxu0 0.0
        %1742 = vmatpush1.msra.mxu0 0.0
        %1743 = vmatprep.mubr.f32.mxu0 0.0
        %1744 = vmatmul.mubr.f32.gmra.mrb[0].mxu0 %v1677
        %v1745 = vpop.f32.mrb[0].mxu0
        %v1746 = vadd.f32 %v1675, %v1745
        %v1747 = vpop.f32.mrb[0].mxu0
        %1748 = vdwg.mxu0
        %vm1749 = vcmask 24576
        %1750 = vst.msk [vmem:[%s405] sm:$0x1] %vm1749, %v1746
        %s1751 = sand.u32 %s291, 1
        %s1752 = scalar_lea.sflag [#allocation3], %s1751
        %s1753 = sand.u32 %s291, 1
        %s1754 = scalar_lea.vmem [#allocation2], %s1753
        // Predicated region
        $region69: #{full_model_forward.1} parent=67 // pred_check
          %p1755 = pneg %p301
        $region70: #{full_model_forward.1} parent=67 // pred_check_branch
          %1757 = sbr.rel (%p1755) target = $region72
        $region71: #{full_model_forward.1} parent=67 // pred_region
          %s1759 = ssub.s32 16, 16
          %1760 = vsyncadd %s1752, %s1759
          %s1761 = smul.addr %s26, 16
          %s1762 = scalar_lea.hbm %s12, %s1761
          %s1764 = sshll.u32 %s1754, 4
          %s1765 = int_to_ptr.vmem [resolvable:$true] %s1764
          %1767 = dma.vmem_to_hbm [thread:$0]  %s1765, 16, %s1762, %s1752
        $region72: #{full_model_forward.1} parent=67 // pred_fallthru
          _
      $region68: #{full_model_forward.1} parent=5 // pred_fallthru
        _
      %p1768 = scmp.le.s32.totalorder 2, %s21
      // Predicated region
      $region73: #{full_model_forward.1} parent=5 // pred_check
        %p1769 = pneg %p1768
      $region74: #{full_model_forward.1} parent=5 // pred_check_branch
        %1771 = sbr.rel (%p1769) target = $region76
      $region75: #{full_model_forward.1} parent=5 // pred_region
        %s1772 = ssub.s32 %s21, 2
        // Predicated region
        $region77: #{full_model_forward.1} parent=75 // pred_check
          %p1773 = pneg %p307
        $region78: #{full_model_forward.1} parent=75 // pred_check_branch
          %1775 = sbr.rel (%p1773) target = $region80
        $region79: #{full_model_forward.1} parent=75 // pred_region
          %s1776 = sand.u32 %s292, 1
          %s1777 = scalar_lea.sflag [#allocation3], %s1776
          %s1778 = sand.u32 %s292, 1
          %s1779 = scalar_lea.vmem [#allocation2], %s1778
          %1780 = dma.done %s1777, 16
        $region80: #{full_model_forward.1} parent=75 // pred_fallthru
          _
      $region76: #{full_model_forward.1} parent=5 // pred_fallthru
        _
    $region6: #{full_model_forward.1} parent=1 // loop_footer
      %s25 = sadd.s32 1, %s21
    $region7: #{full_model_forward.1} parent=1 // loop_footer_branch
      %20 = sbr.rel target = $region3
    $region8: #{full_model_forward.1} parent=1 // loop_exit
      _
    %1781 = vsyncpa [#allocation3], 1
    %s1782 = scalar_lea.sflag [#allocation3], 1
    %1783 = vsyncpa %s1782, 1

</llo_original>
